<compile_context>
chip_gen: v5e
topology: v5e:2x2
jax: 0.10.0
libtpu: 0.0.40
codegen_flags: <defaults>
</compile_context>

<pallas_src>
import functools

import jax
import jax.numpy as jnp
from jax import lax
from jax.experimental import pallas as pl
from jax.experimental.pallas import tpu as pltpu


def _round_up(x, m):
    return (x + m - 1) // m * m


def _cdiv(a, b):
    return (a + b - 1) // b


def _default_cout_split():
    """2-way Cout split on v7x (2 TensorCores/chip); 1 on v5e/v6e."""
    try:
        kind = jax.devices()[0].device_kind.lower()
    except Exception:
        return 1
    return 2 if ("v7" in kind or "7x" in kind) else 1


def _choose_geometry(n, c, h, w, cout_split):
    """Static tiling decisions for a (N, C, H, W) 1x1-conv + BN + add problem."""
    m = n * h * w
    m_pad = _round_up(m, 16)  # whole (16,128) bf16 / (8,128) f32 vregs

    # Cout: full width per core (lane-dense stores); pad only what the lane
    # constraint / core split requires.
    c_out_pad = _round_up(c, 128 * cout_split)
    tile_n = c_out_pad // cout_split

    # Cin (reduction): lane-aligned tile_k, >=2 grid steps for DMA/compute
    # overlap, minimal zero padding, double-buffered weight block <= ~10 MiB.
    max_wt_block_bytes = 10 * 1024 * 1024  # per buffer, bf16
    best = None
    for nk in range(2, 9):
        tile_k = _round_up(_cdiv(c, nk), 128)
        c_k_pad = nk * tile_k
        wt_block = tile_k * tile_n * 2
        if wt_block > max_wt_block_bytes:
            continue
        key = (c_k_pad, nk)  # minimize padding first, then number of steps
        if best is None or key < best[0]:
            best = (key, tile_k, nk, c_k_pad)
    if best is None:  # very small C: single lane-aligned K tile
        tile_k = _round_up(c, 128)
        nk, c_k_pad = 1, tile_k
    else:
        _, tile_k, nk, c_k_pad = best

    return dict(m_pad=m_pad, c_out_pad=c_out_pad, tile_n=tile_n, nj=cout_split,
                tile_k=tile_k, nk=nk, c_k_pad=c_k_pad)


def prepare_params(weight, gamma, beta, geom):
    """One-time weight / BN-parameter preprocessing (hoisted out of hot path)."""
    c_out, c_in = weight.shape
    wt = jnp.transpose(weight, (1, 0))  # (Cin, Cout)
    wt = jnp.pad(wt, ((0, geom["c_k_pad"] - c_in), (0, geom["c_out_pad"] - c_out)))
    wt = wt.astype(jnp.bfloat16)
    gamma2 = jnp.pad(gamma.astype(jnp.float32),
                     (0, geom["c_out_pad"] - c_out)).reshape(1, -1)
    beta2 = jnp.pad(beta.astype(jnp.float32),
                    (0, geom["c_out_pad"] - c_out)).reshape(1, -1)
    return wt, gamma2, beta2


def _make_kernel(m_real, m_pad, eps):
    inv_m = 1.0 / float(m_real)

    def kernel(x_ref, wt_ref, gamma_ref, beta_ref, res_ref, o_ref, acc_ref):
        k = pl.program_id(1)

        @pl.when(k == 0)
        def _():
            acc_ref[...] = jnp.zeros_like(acc_ref)

        # bf16 x bf16 -> f32 accumulate on the MXU.
        acc_ref[...] += jnp.dot(
            x_ref[...], wt_ref[...], preferred_element_type=jnp.float32
        )

        @pl.when(k == pl.num_programs(1) - 1)
        def _():
            y = acc_ref[...]
            # Batch statistics over the real M rows; padded X rows are zero so
            # their conv output is zero and does not perturb the sum.
            mean = jnp.sum(y, axis=0, keepdims=True) * inv_m
            centered = y - mean
            if m_pad != m_real:
                row = lax.broadcasted_iota(jnp.int32, (m_pad, 1), 0)
                cent_stats = jnp.where(row < m_real, centered, 0.0)
            else:
                cent_stats = centered
            var = jnp.sum(cent_stats * cent_stats, axis=0, keepdims=True) * inv_m
            inv_std = lax.rsqrt(var + eps)
            o_ref[...] = (
                res_ref[...] + centered * (inv_std * gamma_ref[...]) + beta_ref[...]
            )

    return kernel


@functools.partial(
    jax.jit,
    static_argnames=("n", "c", "h", "w", "eps", "m_pad", "c_k_pad", "c_out_pad",
                     "tile_k", "tile_n", "nj", "nk"),
)
def _conv_bn_add_impl(x327, x315, wt, gamma2, beta2, *, n, c, h, w, eps,
                      m_pad, c_k_pad, c_out_pad, tile_k, tile_n, nj, nk):
    m = n * h * w

    # NCHW -> channels-last (M, C); zero-pad rows/columns (padded entries
    # contribute exactly zero to the matmul and are masked out of BN stats).
    x2d = jnp.transpose(x327, (0, 2, 3, 1)).reshape(m, c)
    res2d = jnp.transpose(x315, (0, 2, 3, 1)).reshape(m, c)
    x2d = jnp.pad(x2d, ((0, m_pad - m), (0, c_k_pad - c))).astype(jnp.bfloat16)
    res2d = jnp.pad(res2d, ((0, m_pad - m), (0, c_out_pad - c)))

    kernel = _make_kernel(m, m_pad, eps)

    bytes_accessed = (
        x2d.size * 2            # activations (bf16)
        + wt.size * 2           # weight (bf16), dominant stream, read once
        + res2d.size * 4        # residual (f32)
        + m_pad * c_out_pad * 4  # output (f32)
        + 2 * c_out_pad * 4     # gamma / beta
    )
    cost = pl.CostEstimate(
        flops=2 * m_pad * c_k_pad * c_out_pad,
        transcendentals=0,
        bytes_accessed=bytes_accessed,
    )

    out2d = pl.pallas_call(
        kernel,
        out_shape=jax.ShapeDtypeStruct((m_pad, c_out_pad), jnp.float32),
        grid=(nj, nk),
        in_specs=[
            pl.BlockSpec((m_pad, tile_k), lambda j, k: (0, k)),    # X        (M, tk)
            pl.BlockSpec((tile_k, tile_n), lambda j, k: (k, j)),   # W^T      (tk, tn)
            pl.BlockSpec((1, tile_n), lambda j, k: (0, j)),        # gamma    (1, tn)
            pl.BlockSpec((1, tile_n), lambda j, k: (0, j)),        # beta     (1, tn)
            pl.BlockSpec((m_pad, tile_n), lambda j, k: (0, j)),    # residual (M, tn)
        ],
        out_specs=pl.BlockSpec((m_pad, tile_n), lambda j, k: (0, j)),
        scratch_shapes=[pltpu.VMEM((m_pad, tile_n), jnp.float32)],
        compiler_params=pltpu.CompilerParams(
            dimension_semantics=("parallel", "arbitrary"),
            vmem_limit_bytes=48 * 1024 * 1024,
        ),
        cost_estimate=cost,
    )(x2d, wt, gamma2, beta2, res2d)

    out2d = out2d[:m, :c]
    return jnp.transpose(out2d.reshape(n, h, w, c), (0, 3, 1, 2))


def conv_bn_add(x327, x315, weight, gamma, beta, eps=1e-5, cout_split=None):
    """x327, x315: (N, C, H, W) f32; weight: (C, C) 1x1-conv weight; gamma/beta: (C,)."""
    n, c, h, w = x327.shape
    assert weight.shape == (c, c), "module uses a square 1x1 conv (Cin == Cout)"
    if cout_split is None:
        cout_split = _default_cout_split()
    geom = _choose_geometry(n, c, h, w, cout_split)
    # NOTE: in a real training/inference loop, prepare_params is called once
    # and the result reused across steps (hoisted out of the hot path).
    wt, gamma2, beta2 = prepare_params(weight, gamma, beta, geom)
    return _conv_bn_add_impl(
        x327, x315, wt, gamma2, beta2,
        n=n, c=c, h=h, w=w, eps=eps,
        m_pad=geom["m_pad"], c_k_pad=geom["c_k_pad"], c_out_pad=geom["c_out_pad"],
        tile_k=geom["tile_k"], tile_n=geom["tile_n"], nj=geom["nj"], nk=geom["nk"],
    )


def reference_f32(x327, x315, weight, gamma, beta, eps=1e-5):
    """Pure-JAX f32 reference of the module semantics (train-mode BN, biased var)."""
    n, c, h, w = x327.shape
    x2d = jnp.transpose(x327, (0, 2, 3, 1)).reshape(-1, c)
    y = x2d @ weight.T
    mean = y.mean(axis=0, keepdims=True)
    var = ((y - mean) ** 2).mean(axis=0, keepdims=True)
    yn = (y - mean) / jnp.sqrt(var + eps) * gamma[None, :] + beta[None, :]
    yn = jnp.transpose(yn.reshape(n, h, w, c), (0, 3, 1, 2))
    return x315 + yn


def reference_bf16_matmul(x327, x315, weight, gamma, beta, eps=1e-5):
    """Same semantics but with the conv matmul in bf16 (kernel's compute dtype)."""
    n, c, h, w = x327.shape
    x2d = jnp.transpose(x327, (0, 2, 3, 1)).reshape(-1, c)
    y = jnp.dot(
        x2d.astype(jnp.bfloat16),
        weight.T.astype(jnp.bfloat16),
        preferred_element_type=jnp.float32,
    )
    mean = y.mean(axis=0, keepdims=True)
    var = ((y - mean) ** 2).mean(axis=0, keepdims=True)
    yn = (y - mean) / jnp.sqrt(var + eps) * gamma[None, :] + beta[None, :]
    yn = jnp.transpose(yn.reshape(n, h, w, c), (0, 3, 1, 2))
    return x315 + yn


if __name__ == "__main__":
    # Small shapes consistent with the module (original: N=1, C=3712, H=W=7).
    # C=320 exercises Cin/Cout padding and a multi-step K grid (nk=3 here).
    N, C, H, W = 2, 320, 7, 7

    key = jax.random.PRNGKey(0)
    k1, k2, k3, k4, k5 = jax.random.split(key, 5)
    x327 = jax.random.normal(k1, (N, C, H, W), dtype=jnp.float32)
    x315 = jax.random.normal(k2, (N, C, H, W), dtype=jnp.float32)
    weight = jax.random.normal(k3, (C, C), dtype=jnp.float32) * 0.02   # Conv2d 1x1
    gamma = 1.0 + 0.1 * jax.random.normal(k4, (C,), dtype=jnp.float32)  # BN weight
    beta = 0.1 * jax.random.normal(k5, (C,), dtype=jnp.float32)         # BN bias

    ref_bf = jax.block_until_ready(reference_bf16_matmul(x327, x315, weight, gamma, beta))
    ref_f32 = jax.block_until_ready(reference_f32(x327, x315, weight, gamma, beta))

    # Exercise both the single-core (v5e/v6e) and the 2-way Cout-split (v7x)
    # grid layouts, whichever chip we happen to be on.
    for split in (1, 2):
        out = conv_bn_add(x327, x315, weight, gamma, beta, cout_split=split)
        out = jax.block_until_ready(out)
        assert out.shape == (N, C, H, W)
        # Tight check against a reference using the same bf16 matmul dtype.
        assert jnp.allclose(out, ref_bf, atol=1e-3, rtol=1e-3), (
            f"mismatch vs bf16-matmul reference (cout_split={split})")
        # Looser check against the full-f32 module semantics (bf16 conv rounding).
        assert jnp.allclose(out, ref_f32, atol=3e-2, rtol=3e-2), (
            f"mismatch vs f32 reference (cout_split={split})")

    print("KERNEL_OK")
</pallas_src>

<mosaic_0001>
module attributes {stable_mosaic.version = 11 : i64} {
  func.func @kernel(%arg0: i32, %arg1: i32, %arg2: memref<112x128xbf16, #tpu.memory_space<vmem>>, %arg3: memref<128x384xbf16, #tpu.memory_space<vmem>>, %arg4: memref<1x384xf32, #tpu.memory_space<vmem>>, %arg5: memref<1x384xf32, #tpu.memory_space<vmem>>, %arg6: memref<112x384xf32, #tpu.memory_space<vmem>>, %arg7: memref<112x384xf32, #tpu.memory_space<vmem>>, %arg8: memref<112x384xf32, #tpu.memory_space<vmem>>) attributes {dimension_semantics = [#tpu.dimension_semantics<parallel>, #tpu.dimension_semantics<arbitrary>], iteration_bounds = array<i64: 1, 3>, scalar_prefetch = 0 : i64, scratch_operands = 1 : i64, tpu.core_type = #tpu.core_type<tc>, window_params = [{transform_indices = @transform_0, window_bounds = array<i64: 112, 128>}, {transform_indices = @transform_1, window_bounds = array<i64: 128, 384>}, {transform_indices = @transform_2, window_bounds = array<i64: 1, 384>}, {transform_indices = @transform_3, window_bounds = array<i64: 1, 384>}, {transform_indices = @transform_4, window_bounds = array<i64: 112, 384>}, {transform_indices = @transform_5, window_bounds = array<i64: 112, 384>}]} {
    %c0_i32 = arith.constant 0 : i32
    %0 = arith.cmpi eq, %arg1, %c0_i32 : i32
    %1 = arith.extui %0 : i1 to i32
    %c0_i32_0 = arith.constant 0 : i32
    %2 = arith.cmpi ne, %1, %c0_i32_0 : i32
    scf.if %2 {
      %cst_9 = arith.constant 0.000000e+00 : f32
      %12 = vector.broadcast %cst_9 : f32 to vector<112x384xf32>
      %c0_10 = arith.constant 0 : index
      %c0_11 = arith.constant 0 : index
      %13 = vector.load %arg8[%c0_10, %c0_11] : memref<112x384xf32, #tpu.memory_space<vmem>>, vector<112x384xf32>
      tpu.vector_store %arg8[%c0_10, %c0_11], %12 {strides = array<i32>} : memref<112x384xf32, #tpu.memory_space<vmem>>, vector<112x384xf32>,
    } else {
    }
    %c0 = arith.constant 0 : index
    %c0_1 = arith.constant 0 : index
    %3 = vector.load %arg8[%c0, %c0_1] : memref<112x384xf32, #tpu.memory_space<vmem>>, vector<112x384xf32>
    %c0_2 = arith.constant 0 : index
    %c0_3 = arith.constant 0 : index
    %4 = vector.load %arg2[%c0_2, %c0_3] : memref<112x128xbf16, #tpu.memory_space<vmem>>, vector<112x128xbf16>
    %c0_4 = arith.constant 0 : index
    %c0_5 = arith.constant 0 : index
    %5 = vector.load %arg3[%c0_4, %c0_5] : memref<128x384xbf16, #tpu.memory_space<vmem>>, vector<128x384xbf16>
    %cst = arith.constant dense<0.000000e+00> : vector<112x384xf32>
    %6 = tpu.matmul %4, %5, %cst {dimension_numbers = #tpu.dot_dimension_numbers<[1], [0], [0], [1], [0, 0, 1, 1], [], []>} : vector<112x128xbf16>, vector<128x384xbf16>, vector<112x384xf32> -> vector<112x384xf32>
    %7 = arith.addf %3, %6 : vector<112x384xf32>
    %c0_6 = arith.constant 0 : index
    %c0_7 = arith.constant 0 : index
    %8 = vector.load %arg8[%c0_6, %c0_7] : memref<112x384xf32, #tpu.memory_space<vmem>>, vector<112x384xf32>
    tpu.vector_store %arg8[%c0_6, %c0_7], %7 {strides = array<i32>} : memref<112x384xf32, #tpu.memory_space<vmem>>, vector<112x384xf32>,
    %c2_i32 = arith.constant 2 : i32
    %9 = arith.cmpi eq, %arg1, %c2_i32 : i32
    %10 = arith.extui %9 : i1 to i32
    %c0_i32_8 = arith.constant 0 : i32
    %11 = arith.cmpi ne, %10, %c0_i32_8 : i32
    scf.if %11 {
      %c0_9 = arith.constant 0 : index
      %c0_10 = arith.constant 0 : index
      %12 = vector.load %arg8[%c0_9, %c0_10] : memref<112x384xf32, #tpu.memory_space<vmem>>, vector<112x384xf32>
      %cst_11 = arith.constant dense<0.000000e+00> : vector<384xf32>
      %13 = vector.multi_reduction <add>, %12, %cst_11 [0] : vector<112x384xf32> to vector<384xf32>
      %14 = vector.shape_cast %13 : vector<384xf32> to vector<1x384xf32>
      %cst_12 = arith.constant 0.0102040814 : f32
      %15 = vector.broadcast %cst_12 : f32 to vector<1x384xf32>
      %16 = arith.mulf %14, %15 : vector<1x384xf32>
      %17 = vector.broadcast %16 : vector<1x384xf32> to vector<112x384xf32>
      %18 = arith.subf %12, %17 : vector<112x384xf32>
      %19 = tpu.iota {dimensions = array<i32: 0>} : vector<112x1xi32>
      %c98_i32 = arith.constant 98 : i32
      %20 = vector.broadcast %c98_i32 : i32 to vector<112x1xi32>
      %21 = arith.cmpi slt, %19, %20 : vector<112x1xi32>
      %cst_13 = arith.constant 0.000000e+00 : f32
      %22 = vector.shape_cast %21 : vector<112x1xi1> to vector<112x1xi1>
      %23 = vector.broadcast %22 : vector<112x1xi1> to vector<112x384xi1>
      %24 = vector.broadcast %cst_13 : f32 to vector<112x384xf32>
      %25 = arith.select %23, %18, %24 : vector<112x384xi1>, vector<112x384xf32>
      %26 = arith.mulf %25, %25 : vector<112x384xf32>
      %cst_14 = arith.constant dense<0.000000e+00> : vector<384xf32>
      %27 = vector.multi_reduction <add>, %26, %cst_14 [0] : vector<112x384xf32> to vector<384xf32>
      %28 = vector.shape_cast %27 : vector<384xf32> to vector<1x384xf32>
      %cst_15 = arith.constant 0.0102040814 : f32
      %29 = vector.broadcast %cst_15 : f32 to vector<1x384xf32>
      %30 = arith.mulf %28, %29 : vector<1x384xf32>
      %cst_16 = arith.constant 9.99999974E-6 : f32
      %31 = vector.broadcast %cst_16 : f32 to vector<1x384xf32>
      %32 = arith.addf %30, %31 : vector<1x384xf32>
      %33 = math.rsqrt %32 : vector<1x384xf32>
      %c0_17 = arith.constant 0 : index
      %c0_18 = arith.constant 0 : index
      %34 = vector.load %arg6[%c0_17, %c0_18] : memref<112x384xf32, #tpu.memory_space<vmem>>, vector<112x384xf32>
      %c0_19 = arith.constant 0 : index
      %c0_20 = arith.constant 0 : index
      %35 = vector.load %arg4[%c0_19, %c0_20] : memref<1x384xf32, #tpu.memory_space<vmem>>, vector<1x384xf32>
      %36 = arith.mulf %33, %35 : vector<1x384xf32>
      %37 = vector.broadcast %36 : vector<1x384xf32> to vector<112x384xf32>
      %38 = arith.mulf %18, %37 : vector<112x384xf32>
      %39 = arith.addf %34, %38 : vector<112x384xf32>
      %c0_21 = arith.constant 0 : index
      %c0_22 = arith.constant 0 : index
      %40 = vector.load %arg5[%c0_21, %c0_22] : memref<1x384xf32, #tpu.memory_space<vmem>>, vector<1x384xf32>
      %41 = vector.broadcast %40 : vector<1x384xf32> to vector<112x384xf32>
      %42 = arith.addf %39, %41 : vector<112x384xf32>
      %c0_23 = arith.constant 0 : index
      %c0_24 = arith.constant 0 : index
      %43 = vector.load %arg7[%c0_23, %c0_24] : memref<112x384xf32, #tpu.memory_space<vmem>>, vector<112x384xf32>
      tpu.vector_store %arg7[%c0_23, %c0_24], %42 {strides = array<i32>} : memref<112x384xf32, #tpu.memory_space<vmem>>, vector<112x384xf32>,
    } else {
    }
    return
  }
  func.func @transform_0(%arg0: i32, %arg1: i32) -> (i32, i32) {
    %c0_i32 = arith.constant 0 : i32
    %c0_i32_0 = arith.constant 0 : i32
    return %c0_i32, %arg1 : i32, i32
  }
  func.func @transform_1(%arg0: i32, %arg1: i32) -> (i32, i32) {
    %c0_i32 = arith.constant 0 : i32
    return %arg1, %arg0 : i32, i32
  }
  func.func @transform_2(%arg0: i32, %arg1: i32) -> (i32, i32) {
    %c0_i32 = arith.constant 0 : i32
    %c0_i32_0 = arith.constant 0 : i32
    return %c0_i32, %arg0 : i32, i32
  }
  func.func @transform_3(%arg0: i32, %arg1: i32) -> (i32, i32) {
    %c0_i32 = arith.constant 0 : i32
    %c0_i32_0 = arith.constant 0 : i32
    return %c0_i32, %arg0 : i32, i32
  }
  func.func @transform_4(%arg0: i32, %arg1: i32) -> (i32, i32) {
    %c0_i32 = arith.constant 0 : i32
    %c0_i32_0 = arith.constant 0 : i32
    return %c0_i32, %arg0 : i32, i32
  }
  func.func @transform_5(%arg0: i32, %arg1: i32) -> (i32, i32) {
    %c0_i32 = arith.constant 0 : i32
    %c0_i32_0 = arith.constant 0 : i32
    return %c0_i32, %arg0 : i32, i32
  }
}

</mosaic_0001>

<llo_original>
// kernel: _conv_bn_add_impl.1
$region0: #{_conv_bn_add_impl.1}
  #allocation0 [shape = 'u32[]', space=smem, size = 0x4, offset = 0x4, fixed_abs, tag = 'smem constant byte address 0x4 - core index']
  #allocation1 [shape = 'u32[72,128]{1,0:T(1,128)}', space=vmem, size = 0x9000, scoped, tag = 'internal scratch']
  #allocation2 [shape = 'f32[112,384]{1,0:T(8,128)}', space=vmem, size = 0x2a000, scoped, tag = 'scratch operand']
  %s0 = inlined_call_operand.vmem [shape: bf16[112,384], index: 0, kind: input, shape index: {}]
  %s1 = inlined_call_operand.vmem [shape: bf16[384,384], index: 1, kind: input, shape index: {}]
  %s2 = inlined_call_operand.vmem [shape: f32[1,384], index: 2, kind: input, shape index: {}]
  %s3 = inlined_call_operand.vmem [shape: f32[1,384], index: 3, kind: input, shape index: {}]
  %s4 = inlined_call_operand.vmem [shape: f32[112,384], index: 4, kind: input, shape index: {}]
  %s5 = inlined_call_operand.vmem [shape: f32[112,384], index: 5, kind: output, shape index: {}]
  %s6 = sld [smem:[#allocation0]]
  $region102: #{_conv_bn_add_impl.1} parent=0
    _
  %s8 = ssub.s32 1, %s6
  %s9 = scalar_select 0, %s8, %s6
  $region1: #{_conv_bn_add_impl.1} parent=0
    #allocation3 [shape = 'u8[57344]{0}', space=vmem, size = 0xe000, scoped, tag = 'input window, operand 0']
    loop: start=0, step=1, limit=5
    $region2: #{_conv_bn_add_impl.1} parent=1 // loop_pre_header
      _
    $region3: #{_conv_bn_add_impl.1} parent=1 // loop_header
      %s11 = sphi 0, %s15
      %p12 = scmp.ge.s32.totalorder %s11, 5
      %s18 = sphi 0, %s30
      %s19 = sphi 0, %s26
      %s20 = sphi 0, %s18
      %s21 = sphi 0, %s19
      %s22 = sphi 0, %s20
      %s23 = sphi 0, %s21
      %s33 = sphi 0, %s35
      %s36 = sphi 0, %s33
      %s37 = sphi 0, %s36
      %s53 = sphi 0, %s37
      %s61 = sphi 0, %s63
      %s64 = sphi 0, %s61
      %s65 = sphi 0, %s64
      %s81 = sphi 0, %s65
      %s87 = sphi 0, %s89
      %s90 = sphi 0, %s87
      %s91 = sphi 0, %s90
      %s107 = sphi 0, %s91
      %s113 = sphi 0, %s115
      %s116 = sphi 0, %s113
      %s117 = sphi 0, %s116
      %s133 = sphi 0, %s117
      %s139 = sphi 0, %s141
      %s142 = sphi 0, %s139
      %s143 = sphi 0, %s142
      %s159 = sphi 0, %s143
      %s165 = sphi 0, %s167
      %s168 = sphi 0, %s165
      %s169 = sphi 0, %s168
      %s185 = sphi 0, %s169
    $region4: #{_conv_bn_add_impl.1} parent=1 // loop_header_branch
      %14 = sbr.rel (%p12) target = $region8
    $region5: #{_conv_bn_add_impl.1} parent=1 // loop_body
      %s16 = ssub.s32 %s11, 1
      %s17 = ssub.s32 %s11, 2
      %s24 = sadd.s32 1, %s19
      %p25 = scmp.ge.s32.totalorder %s24, 3
      %s26 = scalar_select %p25, 0, %s24
      %s27 = sadd.s32 1, %s18
      %s28 = scalar_select %p25, %s27, %s18
      %p29 = scmp.ge.s32.totalorder %s28, 1
      %s30 = scalar_select %p29, 0, %s28
      %s31 = ssub.s32 %s19, %s26
      %p32 = scmp.eq.s32.totalorder %s31, 0
      %s34 = sadd.s32 %s33, 1
      %s35 = scalar_select %p32, %s33, %s34
      %p38 = pneg %p32
      %p39 = scmp.eq.s32.totalorder %s11, 2
      %p40 = por %p38, %p39
      %p41 = scmp.ne.s32.totalorder %s33, %s36
      %p42 = scmp.eq.s32.totalorder %s11, 0
      %p43 = por %p41, %p42
      %p44 = scmp.ne.s32.totalorder %s33, %s36
      %p45 = scmp.eq.s32.totalorder %s16, 2
      %p46 = por %p44, %p45
      %p47 = scmp.ne.s32.totalorder %s36, %s37
      %p48 = scmp.eq.s32.totalorder %s16, 0
      %p49 = por %p47, %p48
      %p50 = scmp.ne.s32.totalorder %s36, %s37
      %p51 = scmp.eq.s32.totalorder %s17, 2
      %p52 = por %p50, %p51
      %p54 = scmp.ne.s32.totalorder %s37, %s53
      %p55 = scmp.eq.s32.totalorder %s17, 0
      %p56 = por %p54, %p55
      %s57 = ssub.s32 %s19, %s26
      %s58 = ssub.s32 %s18, %s30
      %s59 = sor.u32 %s57, %s58
      %p60 = scmp.eq.s32.totalorder %s59, 0
      %s62 = sadd.s32 %s61, 1
      %s63 = scalar_select %p60, %s61, %s62
      %p66 = pneg %p60
      %p67 = scmp.eq.s32.totalorder %s11, 2
      %p68 = por %p66, %p67
      %p69 = scmp.ne.s32.totalorder %s61, %s64
      %p70 = scmp.eq.s32.totalorder %s11, 0
      %p71 = por %p69, %p70
      %p72 = scmp.ne.s32.totalorder %s61, %s64
      %p73 = scmp.eq.s32.totalorder %s16, 2
      %p74 = por %p72, %p73
      %p75 = scmp.ne.s32.totalorder %s64, %s65
      %p76 = scmp.eq.s32.totalorder %s16, 0
      %p77 = por %p75, %p76
      %p78 = scmp.ne.s32.totalorder %s64, %s65
      %p79 = scmp.eq.s32.totalorder %s17, 2
      %p80 = por %p78, %p79
      %p82 = scmp.ne.s32.totalorder %s65, %s81
      %p83 = scmp.eq.s32.totalorder %s17, 0
      %p84 = por %p82, %p83
      %s85 = ssub.s32 %s18, %s30
      %p86 = scmp.eq.s32.totalorder %s85, 0
      %s88 = sadd.s32 %s87, 1
      %s89 = scalar_select %p86, %s87, %s88
      %p92 = pneg %p86
      %p93 = scmp.eq.s32.totalorder %s11, 2
      %p94 = por %p92, %p93
      %p95 = scmp.ne.s32.totalorder %s87, %s90
      %p96 = scmp.eq.s32.totalorder %s11, 0
      %p97 = por %p95, %p96
      %p98 = scmp.ne.s32.totalorder %s87, %s90
      %p99 = scmp.eq.s32.totalorder %s16, 2
      %p100 = por %p98, %p99
      %p101 = scmp.ne.s32.totalorder %s90, %s91
      %p102 = scmp.eq.s32.totalorder %s16, 0
      %p103 = por %p101, %p102
      %p104 = scmp.ne.s32.totalorder %s90, %s91
      %p105 = scmp.eq.s32.totalorder %s17, 2
      %p106 = por %p104, %p105
      %p108 = scmp.ne.s32.totalorder %s91, %s107
      %p109 = scmp.eq.s32.totalorder %s17, 0
      %p110 = por %p108, %p109
      %s111 = ssub.s32 %s18, %s30
      %p112 = scmp.eq.s32.totalorder %s111, 0
      %s114 = sadd.s32 %s113, 1
      %s115 = scalar_select %p112, %s113, %s114
      %p118 = pneg %p112
      %p119 = scmp.eq.s32.totalorder %s11, 2
      %p120 = por %p118, %p119
      %p121 = scmp.ne.s32.totalorder %s113, %s116
      %p122 = scmp.eq.s32.totalorder %s11, 0
      %p123 = por %p121, %p122
      %p124 = scmp.ne.s32.totalorder %s113, %s116
      %p125 = scmp.eq.s32.totalorder %s16, 2
      %p126 = por %p124, %p125
      %p127 = scmp.ne.s32.totalorder %s116, %s117
      %p128 = scmp.eq.s32.totalorder %s16, 0
      %p129 = por %p127, %p128
      %p130 = scmp.ne.s32.totalorder %s116, %s117
      %p131 = scmp.eq.s32.totalorder %s17, 2
      %p132 = por %p130, %p131
      %p134 = scmp.ne.s32.totalorder %s117, %s133
      %p135 = scmp.eq.s32.totalorder %s17, 0
      %p136 = por %p134, %p135
      %s137 = ssub.s32 %s18, %s30
      %p138 = scmp.eq.s32.totalorder %s137, 0
      %s140 = sadd.s32 %s139, 1
      %s141 = scalar_select %p138, %s139, %s140
      %p144 = pneg %p138
      %p145 = scmp.eq.s32.totalorder %s11, 2
      %p146 = por %p144, %p145
      %p147 = scmp.ne.s32.totalorder %s139, %s142
      %p148 = scmp.eq.s32.totalorder %s11, 0
      %p149 = por %p147, %p148
      %p150 = scmp.ne.s32.totalorder %s139, %s142
      %p151 = scmp.eq.s32.totalorder %s16, 2
      %p152 = por %p150, %p151
      %p153 = scmp.ne.s32.totalorder %s142, %s143
      %p154 = scmp.eq.s32.totalorder %s16, 0
      %p155 = por %p153, %p154
      %p156 = scmp.ne.s32.totalorder %s142, %s143
      %p157 = scmp.eq.s32.totalorder %s17, 2
      %p158 = por %p156, %p157
      %p160 = scmp.ne.s32.totalorder %s143, %s159
      %p161 = scmp.eq.s32.totalorder %s17, 0
      %p162 = por %p160, %p161
      %s163 = ssub.s32 %s18, %s30
      %p164 = scmp.eq.s32.totalorder %s163, 0
      %s166 = sadd.s32 %s165, 1
      %s167 = scalar_select %p164, %s165, %s166
      %p170 = pneg %p164
      %p171 = scmp.eq.s32.totalorder %s11, 2
      %p172 = por %p170, %p171
      %p173 = scmp.ne.s32.totalorder %s165, %s168
      %p174 = scmp.eq.s32.totalorder %s11, 0
      %p175 = por %p173, %p174
      %p176 = scmp.ne.s32.totalorder %s165, %s168
      %p177 = scmp.eq.s32.totalorder %s16, 2
      %p178 = por %p176, %p177
      %p179 = scmp.ne.s32.totalorder %s168, %s169
      %p180 = scmp.eq.s32.totalorder %s16, 0
      %p181 = por %p179, %p180
      %p182 = scmp.ne.s32.totalorder %s168, %s169
      %p183 = scmp.eq.s32.totalorder %s17, 2
      %p184 = por %p182, %p183
      %p186 = scmp.ne.s32.totalorder %s169, %s185
      %p187 = scmp.eq.s32.totalorder %s17, 0
      %p188 = por %p186, %p187
      %p189 = scmp.le.s32.totalorder 1, %s11
      %p190 = scmp.lt.s32.totalorder %s11, 4
      %p191 = pnand %p189, %p190
      %p192 = pneg %p191
      // Predicated region
      $region9: #{_conv_bn_add_impl.1} parent=5 // pred_check
        _
      $region10: #{_conv_bn_add_impl.1} parent=5 // pred_check_branch
        %194 = sbr.rel (%p191) target = $region12
      $region11: #{_conv_bn_add_impl.1} parent=5 // pred_region
        %s195 = ssub.s32 %s11, 1
        // Predicated region
        $region13: #{_conv_bn_add_impl.1} parent=11 // pred_check
          %p196 = pneg %p103
        $region14: #{_conv_bn_add_impl.1} parent=11 // pred_check_branch
          %198 = sbr.rel (%p196) target = $region16
        $region15: #{_conv_bn_add_impl.1} parent=11 // pred_region
          %s199 = smul.u32 3, %s20
          %p200 = scmp.lt.s32.totalorder %s199, 2
          %s201 = scalar_select %p200, %s199, 2
          %s202 = scalar_lea.vmem %s2, %s201
          %s203 = smul.u32 3, %s20
        $region16: #{_conv_bn_add_impl.1} parent=11 // pred_fallthru
          _
        // Predicated region
        $region17: #{_conv_bn_add_impl.1} parent=11 // pred_check
          %p204 = pneg %p129
        $region18: #{_conv_bn_add_impl.1} parent=11 // pred_check_branch
          %206 = sbr.rel (%p204) target = $region20
        $region19: #{_conv_bn_add_impl.1} parent=11 // pred_region
          %s207 = smul.u32 3, %s20
          %p208 = scmp.lt.s32.totalorder %s207, 2
          %s209 = scalar_select %p208, %s207, 2
          %s210 = scalar_lea.vmem %s3, %s209
          %s211 = smul.u32 3, %s20
        $region20: #{_conv_bn_add_impl.1} parent=11 // pred_fallthru
          _
        // Predicated region
        $region21: #{_conv_bn_add_impl.1} parent=11 // pred_check
          %p212 = pneg %p155
        $region22: #{_conv_bn_add_impl.1} parent=11 // pred_check_branch
          %214 = sbr.rel (%p212) target = $region24
        $region23: #{_conv_bn_add_impl.1} parent=11 // pred_region
          %s215 = smul.u32 3, %s20
          %p216 = scmp.lt.s32.totalorder %s215, 2
          %s217 = scalar_select %p216, %s215, 2
          %s218 = smul.addr %s217, 8
          %s219 = scalar_lea.vmem %s4, %s218
          %s220 = smul.u32 3, %s20
        $region24: #{_conv_bn_add_impl.1} parent=11 // pred_fallthru
          _
      $region12: #{_conv_bn_add_impl.1} parent=5 // pred_fallthru
        _
      %p221 = scmp.lt.s32.totalorder %s11, 3
      // Predicated region
      $region25: #{_conv_bn_add_impl.1} parent=5 // pred_check
        %p222 = pneg %p221
      $region26: #{_conv_bn_add_impl.1} parent=5 // pred_check_branch
        %224 = sbr.rel (%p222) target = $region28
      $region27: #{_conv_bn_add_impl.1} parent=5 // pred_region
        // Predicated region
        $region29: #{_conv_bn_add_impl.1} parent=27 // pred_check
          %p225 = pneg %p43
        $region30: #{_conv_bn_add_impl.1} parent=27 // pred_check_branch
          %227 = sbr.rel (%p225) target = $region32
        $region31: #{_conv_bn_add_impl.1} parent=27 // pred_region
          %s228 = sand.u32 %s33, 1
          %s229 = sand.u32 %s33, 1
          %s230 = smul.addr %s229, 56
          %s231 = scalar_lea.vmem [#allocation3], %s230
          %s232 = smul.addr %s19, 4
          %s233 = scalar_lea.vmem %s0, %s232
          // Predicated region
          $region33: #{_conv_bn_add_impl.1} parent=31 // pred_check
            _
          $region34: #{_conv_bn_add_impl.1} parent=31 // pred_check_branch
            %235 = sbr.rel (0) target = $region36
          $region35: #{_conv_bn_add_impl.1} parent=31 // pred_region
            // Predicated region
            $region37: #{_conv_bn_add_impl.1} parent=35 // pred_check
              _
            $region38: #{_conv_bn_add_impl.1} parent=35 // pred_check_branch
              %237 = sbr.rel target = $region40
            $region39: #{_conv_bn_add_impl.1} parent=35 // pred_region
              // Predicated region
              $region52: #{_conv_bn_add_impl.1} parent=39 // pred_check
                _
              $region53: #{_conv_bn_add_impl.1} parent=39 // pred_check_branch
                %279 = sbr.rel (0) target = $region55
              $region54: #{_conv_bn_add_impl.1} parent=39 // pred_region
                loop: start=0, step=1, limit=1
                $region56: #{_conv_bn_add_impl.1} parent=54 // loop_pre_header
                  _
                $region57: #{_conv_bn_add_impl.1} parent=54 // loop_header
                  %s281 = sphi 0, %s285
                  %p282 = scmp.ge.s32.totalorder %s281, 1
                  %s286 = sphi %s233, %s233
                  %s287 = sphi %s231, %s231
                $region58: #{_conv_bn_add_impl.1} parent=54 // loop_header_branch
                  %284 = sbr.rel (%p282) target = $region62
                $region59: #{_conv_bn_add_impl.1} parent=54 // loop_body
                  _
                $region60: #{_conv_bn_add_impl.1} parent=54 // loop_footer
                  %s285 = sadd.s32 1, %s281
                $region61: #{_conv_bn_add_impl.1} parent=54 // loop_footer_branch
                  %280 = sbr.rel target = $region57
                $region62: #{_conv_bn_add_impl.1} parent=54 // loop_exit
                  _
                %s289 = ssub.s32 16, 1
                loop: start=0, step=1, limit=1
                $region63: #{_conv_bn_add_impl.1} parent=54 // loop_pre_header
                  _
                $region64: #{_conv_bn_add_impl.1} parent=54 // loop_header
                  %s291 = sphi 0, %s295
                  %p292 = scmp.ge.s32.totalorder %s291, 1
                  %s296 = sphi %s233, %s233
                  %s297 = sphi %s231, %s231
                $region65: #{_conv_bn_add_impl.1} parent=54 // loop_header_branch
                  %294 = sbr.rel (%p292) target = $region69
                $region66: #{_conv_bn_add_impl.1} parent=54 // loop_body
                  %v298 = vld [vmem:[%s296] sm:%s289]
                  %299 = vst [vmem:[%s297] sm:%s289] %v298
                  %v300 = vld [vmem:[%s296 + $0xc] sm:%s289]
                  %301 = vst [vmem:[%s297 + $0x4] sm:%s289] %v300
                  %v302 = vld [vmem:[%s296 + $0x18] sm:%s289]
                  %303 = vst [vmem:[%s297 + $0x8] sm:%s289] %v302
                  %v304 = vld [vmem:[%s296 + $0x24] sm:%s289]
                  %305 = vst [vmem:[%s297 + $0xc] sm:%s289] %v304
                  %v306 = vld [vmem:[%s296 + $0x30] sm:%s289]
                  %307 = vst [vmem:[%s297 + $0x10] sm:%s289] %v306
                  %v308 = vld [vmem:[%s296 + $0x3c] sm:%s289]
                  %309 = vst [vmem:[%s297 + $0x14] sm:%s289] %v308
                  %v310 = vld [vmem:[%s296 + $0x48] sm:%s289]
                  %311 = vst [vmem:[%s297 + $0x18] sm:%s289] %v310
                  %v312 = vld [vmem:[%s296 + $0x54] sm:%s289]
                  %313 = vst [vmem:[%s297 + $0x1c] sm:%s289] %v312
                  %v314 = vld [vmem:[%s296 + $0x60] sm:%s289]
                  %315 = vst [vmem:[%s297 + $0x20] sm:%s289] %v314
                  %v316 = vld [vmem:[%s296 + $0x6c] sm:%s289]
                  %317 = vst [vmem:[%s297 + $0x24] sm:%s289] %v316
                  %v318 = vld [vmem:[%s296 + $0x78] sm:%s289]
                  %319 = vst [vmem:[%s297 + $0x28] sm:%s289] %v318
                  %v320 = vld [vmem:[%s296 + $0x84] sm:%s289]
                  %321 = vst [vmem:[%s297 + $0x2c] sm:%s289] %v320
                  %v322 = vld [vmem:[%s296 + $0x90] sm:%s289]
                  %323 = vst [vmem:[%s297 + $0x30] sm:%s289] %v322
                  %v324 = vld [vmem:[%s296 + $0x9c] sm:%s289]
                  %325 = vst [vmem:[%s297 + $0x34] sm:%s289] %v324
                $region67: #{_conv_bn_add_impl.1} parent=54 // loop_footer
                  %s295 = sadd.s32 1, %s291
                $region68: #{_conv_bn_add_impl.1} parent=54 // loop_footer_branch
                  %290 = sbr.rel target = $region64
                $region69: #{_conv_bn_add_impl.1} parent=54 // loop_exit
                  _
              $region55: #{_conv_bn_add_impl.1} parent=39 // pred_fallthru
                _
            $region40: #{_conv_bn_add_impl.1} parent=35 // pred_fallthru
              _
            // Predicated region
            $region41: #{_conv_bn_add_impl.1} parent=35 // pred_check
              _
            $region42: #{_conv_bn_add_impl.1} parent=35 // pred_check_branch
              %239 = sbr.rel (0) target = $region44
            $region43: #{_conv_bn_add_impl.1} parent=35 // pred_region
              %s241 = ssub.s32 16, 1
              loop: start=0, step=1, limit=1
              $region45: #{_conv_bn_add_impl.1} parent=43 // loop_pre_header
                _
              $region46: #{_conv_bn_add_impl.1} parent=43 // loop_header
                %s243 = sphi 0, %s247
                %p244 = scmp.ge.s32.totalorder %s243, 1
                %s248 = sphi %s233, %s233
                %s249 = sphi %s231, %s231
              $region47: #{_conv_bn_add_impl.1} parent=43 // loop_header_branch
                %246 = sbr.rel (%p244) target = $region51
              $region48: #{_conv_bn_add_impl.1} parent=43 // loop_body
                %v250 = vld [vmem:[%s248] sm:%s241]
                %251 = vst [vmem:[%s249] sm:%s241] %v250
                %v252 = vld [vmem:[%s248 + $0xc] sm:%s241]
                %253 = vst [vmem:[%s249 + $0x4] sm:%s241] %v252
                %v254 = vld [vmem:[%s248 + $0x18] sm:%s241]
                %255 = vst [vmem:[%s249 + $0x8] sm:%s241] %v254
                %v256 = vld [vmem:[%s248 + $0x24] sm:%s241]
                %257 = vst [vmem:[%s249 + $0xc] sm:%s241] %v256
                %v258 = vld [vmem:[%s248 + $0x30] sm:%s241]
                %259 = vst [vmem:[%s249 + $0x10] sm:%s241] %v258
                %v260 = vld [vmem:[%s248 + $0x3c] sm:%s241]
                %261 = vst [vmem:[%s249 + $0x14] sm:%s241] %v260
                %v262 = vld [vmem:[%s248 + $0x48] sm:%s241]
                %263 = vst [vmem:[%s249 + $0x18] sm:%s241] %v262
                %v264 = vld [vmem:[%s248 + $0x54] sm:%s241]
                %265 = vst [vmem:[%s249 + $0x1c] sm:%s241] %v264
                %v266 = vld [vmem:[%s248 + $0x60] sm:%s241]
                %267 = vst [vmem:[%s249 + $0x20] sm:%s241] %v266
                %v268 = vld [vmem:[%s248 + $0x6c] sm:%s241]
                %269 = vst [vmem:[%s249 + $0x24] sm:%s241] %v268
                %v270 = vld [vmem:[%s248 + $0x78] sm:%s241]
                %271 = vst [vmem:[%s249 + $0x28] sm:%s241] %v270
                %v272 = vld [vmem:[%s248 + $0x84] sm:%s241]
                %273 = vst [vmem:[%s249 + $0x2c] sm:%s241] %v272
                %v274 = vld [vmem:[%s248 + $0x90] sm:%s241]
                %275 = vst [vmem:[%s249 + $0x30] sm:%s241] %v274
                %v276 = vld [vmem:[%s248 + $0x9c] sm:%s241]
                %277 = vst [vmem:[%s249 + $0x34] sm:%s241] %v276
              $region49: #{_conv_bn_add_impl.1} parent=43 // loop_footer
                %s247 = sadd.s32 1, %s243
              $region50: #{_conv_bn_add_impl.1} parent=43 // loop_footer_branch
                %242 = sbr.rel target = $region46
              $region51: #{_conv_bn_add_impl.1} parent=43 // loop_exit
                _
            $region44: #{_conv_bn_add_impl.1} parent=35 // pred_fallthru
              _
          $region36: #{_conv_bn_add_impl.1} parent=31 // pred_fallthru
            _
          %326 = vnop
        $region32: #{_conv_bn_add_impl.1} parent=27 // pred_fallthru
          _
        // Predicated region
        $region70: #{_conv_bn_add_impl.1} parent=27 // pred_check
          %p327 = pneg %p71
        $region71: #{_conv_bn_add_impl.1} parent=27 // pred_check_branch
          %329 = sbr.rel (%p327) target = $region73
        $region72: #{_conv_bn_add_impl.1} parent=27 // pred_region
          %s330 = smul.u32 16, %s19
          %s331 = smul.u32 3, %s18
          %p332 = scmp.lt.s32.totalorder %s330, 47
          %s333 = scalar_select %p332, %s330, 47
          %p334 = scmp.lt.s32.totalorder %s331, 2
          %s335 = scalar_select %p334, %s331, 2
          %s336 = smul.addr %s333, 3
          %s337 = sadd.s32 %s335, %s336
          %s338 = smul.addr %s337, 4
          %s339 = scalar_lea.vmem %s1, %s338
          %s340 = smul.u32 16, %s19
          %s341 = smul.u32 3, %s18
        $region73: #{_conv_bn_add_impl.1} parent=27 // pred_fallthru
          _
      $region28: #{_conv_bn_add_impl.1} parent=5 // pred_fallthru
        _
      %p342 = scmp.le.s32.totalorder 1, %s11
      %p343 = scmp.lt.s32.totalorder %s11, 4
      %p344 = pnand %p342, %p343
      %p345 = pneg %p344
      // Predicated region
      $region74: #{_conv_bn_add_impl.1} parent=5 // pred_check
        _
      $region75: #{_conv_bn_add_impl.1} parent=5 // pred_check_branch
        %347 = sbr.rel (%p344) target = $region77
      $region76: #{_conv_bn_add_impl.1} parent=5 // pred_region
        %s348 = ssub.s32 %s11, 1
        %s349 = sand.u32 %s36, 1
        %s350 = sand.u32 %s36, 1
        %s351 = smul.addr %s350, 56
        %s352 = scalar_lea.vmem [#allocation3], %s351
        // Predicated region
        $region78: #{_conv_bn_add_impl.1} parent=76 // pred_check
          %p353 = pneg %p49
        $region79: #{_conv_bn_add_impl.1} parent=76 // pred_check_branch
          %355 = sbr.rel (%p353) target = $region81
        $region80: #{_conv_bn_add_impl.1} parent=76 // pred_region
          _
        $region81: #{_conv_bn_add_impl.1} parent=76 // pred_fallthru
          _
        %s356 = sand.u32 %s36, 1
        %s357 = sand.u32 %s36, 1
        %s358 = smul.addr %s357, 56
        %s359 = scalar_lea.vmem [#allocation3], %s358
        %p360 = pneg %p49
        %p361 = pneg %p46
        %s362 = smul.u32 16, %s21
        %s363 = smul.u32 3, %s20
        %p364 = scmp.lt.s32.totalorder %s362, 47
        %s365 = scalar_select %p364, %s362, 47
        %p366 = scmp.lt.s32.totalorder %s363, 2
        %s367 = scalar_select %p366, %s363, 2
        %s368 = smul.addr %s365, 3
        %s369 = sadd.s32 %s367, %s368
        %s370 = smul.addr %s369, 4
        %s371 = scalar_lea.vmem %s1, %s370
        %p372 = pneg %p77
        %p373 = pneg %p74
        %s374 = smul.u32 3, %s20
        %p375 = scmp.lt.s32.totalorder %s374, 2
        %s376 = scalar_select %p375, %s374, 2
        %s377 = scalar_lea.vmem %s2, %s376
        %p378 = pneg %p103
        %p379 = pneg %p100
        %s380 = smul.u32 3, %s20
        %p381 = scmp.lt.s32.totalorder %s380, 2
        %s382 = scalar_select %p381, %s380, 2
        %s383 = scalar_lea.vmem %s3, %s382
        %p384 = pneg %p129
        %p385 = pneg %p126
        %s386 = smul.u32 3, %s20
        %p387 = scmp.lt.s32.totalorder %s386, 2
        %s388 = scalar_select %p387, %s386, 2
        %s389 = smul.addr %s388, 8
        %s390 = scalar_lea.vmem %s4, %s389
        %p391 = pneg %p155
        %p392 = pneg %p152
        %p393 = pneg %p181
        %p394 = pneg %p178
        %s395 = smul.u32 3, %s20
        %p396 = scmp.lt.s32.totalorder %s395, 2
        %s397 = scalar_select %p396, %s395, 2
        %s398 = smul.addr %s397, 8
        %s399 = scalar_lea.vmem %s5, %s398
        %s400 = smul.u32 16, %s21
        %s401 = smul.u32 3, %s20
        %p402 = scmp.lt.s32.totalorder %s400, 47
        %s403 = scalar_select %p402, %s400, 47
        %p404 = scmp.lt.s32.totalorder %s401, 2
        %s405 = scalar_select %p404, %s401, 2
        %s406 = smul.addr %s403, 3
        %s407 = sadd.s32 %s405, %s406
        %s408 = smul.addr %s407, 4
        %s409 = scalar_lea.vmem %s1, %s408
        %s410 = smul.u32 16, %s21
        %s411 = smul.u32 3, %s20
        %s412 = smul.u32 3, %s20
        %p413 = scmp.lt.s32.totalorder %s412, 2
        %s414 = scalar_select %p413, %s412, 2
        %s415 = scalar_lea.vmem %s2, %s414
        %s416 = smul.u32 3, %s20
        %s417 = smul.u32 3, %s20
        %p418 = scmp.lt.s32.totalorder %s417, 2
        %s419 = scalar_select %p418, %s417, 2
        %s420 = scalar_lea.vmem %s3, %s419
        %s421 = smul.u32 3, %s20
        %s422 = smul.u32 3, %s20
        %p423 = scmp.lt.s32.totalorder %s422, 2
        %s424 = scalar_select %p423, %s422, 2
        %s425 = smul.addr %s424, 8
        %s426 = scalar_lea.vmem %s4, %s425
        %s427 = smul.u32 3, %s20
        %s428 = smul.u32 3, %s20
        %p429 = scmp.lt.s32.totalorder %s428, 2
        %s430 = scalar_select %p429, %s428, 2
        %s431 = smul.addr %s430, 8
        %s432 = scalar_lea.vmem %s5, %s431
        %s433 = smul.u32 3, %s20
        %p434 = scmp.eq.s32.totalorder %s21, 0
        // Predicated region
        $region82: #{_conv_bn_add_impl.1} parent=76 // pred_check
          %p435 = pneg %p434
        $region83: #{_conv_bn_add_impl.1} parent=76 // pred_check_branch
          %437 = sbr.rel (%p435) target = $region85
        $region84: #{_conv_bn_add_impl.1} parent=76 // pred_region
          %438 = vst [vmem:[#allocation2] sm:$0xff] 0.0
          %439 = vst [vmem:[#allocation2 + $0x8] sm:$0xff] 0.0
          %440 = vst [vmem:[#allocation2 + $0x10] sm:$0xff] 0.0
          %441 = vst [vmem:[#allocation2 + $0x18] sm:$0xff] 0.0
          %442 = vst [vmem:[#allocation2 + $0x20] sm:$0xff] 0.0
          %443 = vst [vmem:[#allocation2 + $0x28] sm:$0xff] 0.0
          %444 = vst [vmem:[#allocation2 + $0x30] sm:$0xff] 0.0
          %445 = vst [vmem:[#allocation2 + $0x38] sm:$0xff] 0.0
          %446 = vst [vmem:[#allocation2 + $0x40] sm:$0xff] 0.0
          %447 = vst [vmem:[#allocation2 + $0x48] sm:$0xff] 0.0
          %448 = vst [vmem:[#allocation2 + $0x50] sm:$0xff] 0.0
          %449 = vst [vmem:[#allocation2 + $0x58] sm:$0xff] 0.0
          %450 = vst [vmem:[#allocation2 + $0x60] sm:$0xff] 0.0
          %451 = vst [vmem:[#allocation2 + $0x68] sm:$0xff] 0.0
          %452 = vst [vmem:[#allocation2 + $0x70] sm:$0xff] 0.0
          %453 = vst [vmem:[#allocation2 + $0x78] sm:$0xff] 0.0
          %454 = vst [vmem:[#allocation2 + $0x80] sm:$0xff] 0.0
          %455 = vst [vmem:[#allocation2 + $0x88] sm:$0xff] 0.0
          %456 = vst [vmem:[#allocation2 + $0x90] sm:$0xff] 0.0
          %457 = vst [vmem:[#allocation2 + $0x98] sm:$0xff] 0.0
          %458 = vst [vmem:[#allocation2 + $0xa0] sm:$0xff] 0.0
          %459 = vst [vmem:[#allocation2 + $0xa8] sm:$0xff] 0.0
          %460 = vst [vmem:[#allocation2 + $0xb0] sm:$0xff] 0.0
          %461 = vst [vmem:[#allocation2 + $0xb8] sm:$0xff] 0.0
          %462 = vst [vmem:[#allocation2 + $0xc0] sm:$0xff] 0.0
          %463 = vst [vmem:[#allocation2 + $0xc8] sm:$0xff] 0.0
          %464 = vst [vmem:[#allocation2 + $0xd0] sm:$0xff] 0.0
          %465 = vst [vmem:[#allocation2 + $0xd8] sm:$0xff] 0.0
          %466 = vst [vmem:[#allocation2 + $0xe0] sm:$0xff] 0.0
          %467 = vst [vmem:[#allocation2 + $0xe8] sm:$0xff] 0.0
          %468 = vst [vmem:[#allocation2 + $0xf0] sm:$0xff] 0.0
          %469 = vst [vmem:[#allocation2 + $0xf8] sm:$0xff] 0.0
          %470 = vst [vmem:[#allocation2 + $0x100] sm:$0xff] 0.0
          %471 = vst [vmem:[#allocation2 + $0x108] sm:$0xff] 0.0
          %472 = vst [vmem:[#allocation2 + $0x110] sm:$0xff] 0.0
          %473 = vst [vmem:[#allocation2 + $0x118] sm:$0xff] 0.0
          %474 = vst [vmem:[#allocation2 + $0x120] sm:$0xff] 0.0
          %475 = vst [vmem:[#allocation2 + $0x128] sm:$0xff] 0.0
          %476 = vst [vmem:[#allocation2 + $0x130] sm:$0xff] 0.0
          %477 = vst [vmem:[#allocation2 + $0x138] sm:$0xff] 0.0
          %478 = vst [vmem:[#allocation2 + $0x140] sm:$0xff] 0.0
          %479 = vst [vmem:[#allocation2 + $0x148] sm:$0xff] 0.0
        $region85: #{_conv_bn_add_impl.1} parent=76 // pred_fallthru
          _
        %v480 = vld [vmem:[#allocation2] sm:$0xff]
        %v481 = vld [vmem:[#allocation2 + $0x8] sm:$0xff]
        %v482 = vld [vmem:[#allocation2 + $0x10] sm:$0xff]
        %v483 = vld [vmem:[#allocation2 + $0x18] sm:$0xff]
        %v484 = vld [vmem:[#allocation2 + $0x20] sm:$0xff]
        %v485 = vld [vmem:[#allocation2 + $0x28] sm:$0xff]
        %v486 = vld [vmem:[#allocation2 + $0x30] sm:$0xff]
        %v487 = vld [vmem:[#allocation2 + $0x38] sm:$0xff]
        %v488 = vld [vmem:[#allocation2 + $0x40] sm:$0xff]
        %v489 = vld [vmem:[#allocation2 + $0x48] sm:$0xff]
        %v490 = vld [vmem:[#allocation2 + $0x50] sm:$0xff]
        %v491 = vld [vmem:[#allocation2 + $0x58] sm:$0xff]
        %v492 = vld [vmem:[#allocation2 + $0x60] sm:$0xff]
        %v493 = vld [vmem:[#allocation2 + $0x68] sm:$0xff]
        %v494 = vld [vmem:[#allocation2 + $0x70] sm:$0xff]
        %v495 = vld [vmem:[#allocation2 + $0x78] sm:$0xff]
        %v496 = vld [vmem:[#allocation2 + $0x80] sm:$0xff]
        %v497 = vld [vmem:[#allocation2 + $0x88] sm:$0xff]
        %v498 = vld [vmem:[#allocation2 + $0x90] sm:$0xff]
        %v499 = vld [vmem:[#allocation2 + $0x98] sm:$0xff]
        %v500 = vld [vmem:[#allocation2 + $0xa0] sm:$0xff]
        %v501 = vld [vmem:[#allocation2 + $0xa8] sm:$0xff]
        %v502 = vld [vmem:[#allocation2 + $0xb0] sm:$0xff]
        %v503 = vld [vmem:[#allocation2 + $0xb8] sm:$0xff]
        %v504 = vld [vmem:[#allocation2 + $0xc0] sm:$0xff]
        %v505 = vld [vmem:[#allocation2 + $0xc8] sm:$0xff]
        %v506 = vld [vmem:[#allocation2 + $0xd0] sm:$0xff]
        %v507 = vld [vmem:[#allocation2 + $0xd8] sm:$0xff]
        %v508 = vld [vmem:[#allocation2 + $0xe0] sm:$0xff]
        %v509 = vld [vmem:[#allocation2 + $0xe8] sm:$0xff]
        %v510 = vld [vmem:[#allocation2 + $0xf0] sm:$0xff]
        %v511 = vld [vmem:[#allocation2 + $0xf8] sm:$0xff]
        %v512 = vld [vmem:[#allocation2 + $0x100] sm:$0xff]
        %v513 = vld [vmem:[#allocation2 + $0x108] sm:$0xff]
        %v514 = vld [vmem:[#allocation2 + $0x110] sm:$0xff]
        %v515 = vld [vmem:[#allocation2 + $0x118] sm:$0xff]
        %v516 = vld [vmem:[#allocation2 + $0x120] sm:$0xff]
        %v517 = vld [vmem:[#allocation2 + $0x128] sm:$0xff]
        %v518 = vld [vmem:[#allocation2 + $0x130] sm:$0xff]
        %v519 = vld [vmem:[#allocation2 + $0x138] sm:$0xff]
        %v520 = vld [vmem:[#allocation2 + $0x140] sm:$0xff]
        %v521 = vld [vmem:[#allocation2 + $0x148] sm:$0xff]
        %v522 = vld [vmem:[%s352] sm:$0xf]
        %v523 = vld [vmem:[%s352 + $0x4] sm:$0xf]
        %v524 = vld [vmem:[%s352 + $0x8] sm:$0xf]
        %v525 = vld [vmem:[%s352 + $0xc] sm:$0xf]
        %v526 = vld [vmem:[%s352 + $0x10] sm:$0xf]
        %v527 = vld [vmem:[%s352 + $0x14] sm:$0xf]
        %v528 = vld [vmem:[%s352 + $0x18] sm:$0xf]
        %v529 = vld [vmem:[%s352 + $0x1c] sm:$0xf]
        %v530 = vld [vmem:[%s352 + $0x20] sm:$0xf]
        %v531 = vld [vmem:[%s352 + $0x24] sm:$0xf]
        %v532 = vld [vmem:[%s352 + $0x28] sm:$0xf]
        %v533 = vld [vmem:[%s352 + $0x2c] sm:$0xf]
        %v534 = vld [vmem:[%s352 + $0x30] sm:$0xf]
        %v535 = vld [vmem:[%s352 + $0x34] sm:$0xf]
        %v536 = vld [vmem:[%s409] sm:$0xff]
        %v537 = vld [vmem:[%s409 + $0x8] sm:$0xf]
        %v538 = vld [vmem:[%s409 + $0xc] sm:$0xff]
        %v539 = vld [vmem:[%s409 + $0x14] sm:$0xf]
        %v540 = vld [vmem:[%s409 + $0x18] sm:$0xff]
        %v541 = vld [vmem:[%s409 + $0x20] sm:$0xf]
        %v542 = vld [vmem:[%s409 + $0x24] sm:$0xff]
        %v543 = vld [vmem:[%s409 + $0x2c] sm:$0xf]
        %v544 = vld [vmem:[%s409 + $0x30] sm:$0xff]
        %v545 = vld [vmem:[%s409 + $0x38] sm:$0xf]
        %v546 = vld [vmem:[%s409 + $0x3c] sm:$0xff]
        %v547 = vld [vmem:[%s409 + $0x44] sm:$0xf]
        %v548 = vld [vmem:[%s409 + $0x48] sm:$0xff]
        %v549 = vld [vmem:[%s409 + $0x50] sm:$0xf]
        %v550 = vld [vmem:[%s409 + $0x54] sm:$0xff]
        %v551 = vld [vmem:[%s409 + $0x5c] sm:$0xf]
        %v552 = vld [vmem:[%s409 + $0x60] sm:$0xff]
        %v553 = vld [vmem:[%s409 + $0x68] sm:$0xf]
        %v554 = vld [vmem:[%s409 + $0x6c] sm:$0xff]
        %v555 = vld [vmem:[%s409 + $0x74] sm:$0xf]
        %v556 = vld [vmem:[%s409 + $0x78] sm:$0xff]
        %v557 = vld [vmem:[%s409 + $0x80] sm:$0xf]
        %v558 = vld [vmem:[%s409 + $0x84] sm:$0xff]
        %v559 = vld [vmem:[%s409 + $0x8c] sm:$0xf]
        %v560 = vld [vmem:[%s409 + $0x90] sm:$0xff]
        %v561 = vld [vmem:[%s409 + $0x98] sm:$0xf]
        %v562 = vld [vmem:[%s409 + $0x9c] sm:$0xff]
        %v563 = vld [vmem:[%s409 + $0xa4] sm:$0xf]
        %v564 = vld [vmem:[%s409 + $0xa8] sm:$0xff]
        %v565 = vld [vmem:[%s409 + $0xb0] sm:$0xf]
        %v566 = vld [vmem:[%s409 + $0xb4] sm:$0xff]
        %v567 = vld [vmem:[%s409 + $0xbc] sm:$0xf]
        %v582 = vunpack.c.l.b16 %v522
        %v583 = vunpack.c.l.b16 %v523
        %v584 = vunpack.c.l.b16 %v524
        %v585 = vunpack.c.l.b16 %v525
        %v586 = vunpack.c.l.b16 %v526
        %v587 = vunpack.c.l.b16 %v527
        %v588 = vunpack.c.l.b16 %v528
        %v589 = vunpack.c.l.b16 %v529
        %v590 = vunpack.c.l.b16 %v530
        %v591 = vunpack.c.l.b16 %v531
        %v592 = vunpack.c.l.b16 %v532
        %v593 = vunpack.c.l.b16 %v533
        %v594 = vunpack.c.l.b16 %v534
        %v595 = vunpack.c.l.b16 %v535
        %v596 = vpack.c.b16 %v583, %v582
        %v597 = vpack.c.b16 %v585, %v584
        %v598 = vpack.c.b16 %v587, %v586
        %v599 = vpack.c.b16 %v589, %v588
        %v600 = vpack.c.b16 %v591, %v590
        %v601 = vpack.c.b16 %v593, %v592
        %v602 = vpack.c.b16 %v595, %v594
        %v642 = vunpack.c.l.b16 %v536
        %v643 = vunpack.c.h.b16 %v536
        %v644 = vunpack.c.l.b16 %v537
        %v645 = vunpack.c.l.b16 %v538
        %v646 = vunpack.c.h.b16 %v538
        %v647 = vunpack.c.l.b16 %v539
        %v648 = vunpack.c.l.b16 %v540
        %v649 = vunpack.c.h.b16 %v540
        %v650 = vunpack.c.l.b16 %v541
        %v651 = vunpack.c.l.b16 %v542
        %v652 = vunpack.c.h.b16 %v542
        %v653 = vunpack.c.l.b16 %v543
        %v654 = vunpack.c.l.b16 %v544
        %v655 = vunpack.c.h.b16 %v544
        %v656 = vunpack.c.l.b16 %v545
        %v657 = vunpack.c.l.b16 %v546
        %v658 = vunpack.c.h.b16 %v546
        %v659 = vunpack.c.l.b16 %v547
        %v660 = vunpack.c.l.b16 %v548
        %v661 = vunpack.c.h.b16 %v548
        %v662 = vunpack.c.l.b16 %v549
        %v663 = vunpack.c.l.b16 %v550
        %v664 = vunpack.c.h.b16 %v550
        %v665 = vunpack.c.l.b16 %v551
        %v666 = vunpack.c.l.b16 %v552
        %v667 = vunpack.c.h.b16 %v552
        %v668 = vunpack.c.l.b16 %v553
        %v669 = vunpack.c.l.b16 %v554
        %v670 = vunpack.c.h.b16 %v554
        %v671 = vunpack.c.l.b16 %v555
        %v672 = vunpack.c.l.b16 %v556
        %v673 = vunpack.c.h.b16 %v556
        %v674 = vunpack.c.l.b16 %v557
        %v675 = vunpack.c.l.b16 %v558
        %v676 = vunpack.c.h.b16 %v558
        %v677 = vunpack.c.l.b16 %v559
        %v678 = vunpack.c.l.b16 %v560
        %v679 = vunpack.c.h.b16 %v560
        %v680 = vunpack.c.l.b16 %v561
        %v681 = vunpack.c.l.b16 %v562
        %v682 = vunpack.c.h.b16 %v562
        %v683 = vunpack.c.l.b16 %v563
        %v684 = vunpack.c.l.b16 %v564
        %v685 = vunpack.c.h.b16 %v564
        %v686 = vunpack.c.l.b16 %v565
        %v687 = vunpack.c.l.b16 %v566
        %v688 = vunpack.c.h.b16 %v566
        %v689 = vunpack.c.l.b16 %v567
        %v690 = vpack.c.b16 %v645, %v642
        %v691 = vpack.c.b16 %v646, %v643
        %v692 = vpack.c.b16 %v647, %v644
        %v693 = vpack.c.b16 %v651, %v648
        %v694 = vpack.c.b16 %v652, %v649
        %v695 = vpack.c.b16 %v653, %v650
        %v696 = vpack.c.b16 %v657, %v654
        %v697 = vpack.c.b16 %v658, %v655
        %v698 = vpack.c.b16 %v659, %v656
        %v699 = vpack.c.b16 %v663, %v660
        %v700 = vpack.c.b16 %v664, %v661
        %v701 = vpack.c.b16 %v665, %v662
        %v702 = vpack.c.b16 %v669, %v666
        %v703 = vpack.c.b16 %v670, %v667
        %v704 = vpack.c.b16 %v671, %v668
        %v705 = vpack.c.b16 %v675, %v672
        %v706 = vpack.c.b16 %v676, %v673
        %v707 = vpack.c.b16 %v677, %v674
        %v708 = vpack.c.b16 %v681, %v678
        %v709 = vpack.c.b16 %v682, %v679
        %v710 = vpack.c.b16 %v683, %v680
        %v711 = vpack.c.b16 %v687, %v684
        %v712 = vpack.c.b16 %v688, %v685
        %v713 = vpack.c.b16 %v689, %v686
        %738 = vmatpush.bf16.msra.mxu0 %v711
        %739 = vmatpush.bf16.msra.mxu0 %v708
        %740 = vmatpush.bf16.msra.mxu0 %v705
        %741 = vmatpush.bf16.msra.mxu0 %v702
        %742 = vmatpush.bf16.msra.mxu0 %v699
        %743 = vmatpush.bf16.msra.mxu0 %v696
        %744 = vmatpush.bf16.msra.mxu0 %v693
        %745 = vmatpush.bf16.msra.mxu0 %v690
        %746 = vmatmul.bf16.gmra.mxu0 %v596
        %v747 = vpop.f32.mrf.mxu0
        %v748 = vadd.f32 0.0, %v747
        %v749 = vpop.f32.mrf.mxu0
        %v750 = vadd.f32 0.0, %v749
        %751 = vmatmul.bf16.gmra.mxu0 %v597
        %v752 = vpop.f32.mrf.mxu0
        %v753 = vadd.f32 0.0, %v752
        %v754 = vpop.f32.mrf.mxu0
        %v755 = vadd.f32 0.0, %v754
        %756 = vmatmul.bf16.gmra.mxu0 %v598
        %v757 = vpop.f32.mrf.mxu0
        %v758 = vadd.f32 0.0, %v757
        %v759 = vpop.f32.mrf.mxu0
        %v760 = vadd.f32 0.0, %v759
        %761 = vmatmul.bf16.gmra.mxu0 %v599
        %v762 = vpop.f32.mrf.mxu0
        %v763 = vadd.f32 0.0, %v762
        %v764 = vpop.f32.mrf.mxu0
        %v765 = vadd.f32 0.0, %v764
        %766 = vmatmul.bf16.gmra.mxu0 %v600
        %v767 = vpop.f32.mrf.mxu0
        %v768 = vadd.f32 0.0, %v767
        %v769 = vpop.f32.mrf.mxu0
        %v770 = vadd.f32 0.0, %v769
        %771 = vmatmul.bf16.gmra.mxu0 %v601
        %v772 = vpop.f32.mrf.mxu0
        %v773 = vadd.f32 0.0, %v772
        %v774 = vpop.f32.mrf.mxu0
        %v775 = vadd.f32 0.0, %v774
        %776 = vmatmul.bf16.gmra.mxu0 %v602
        %v777 = vpop.f32.mrf.mxu0
        %v778 = vadd.f32 0.0, %v777
        %v779 = vpop.f32.mrf.mxu0
        %v780 = vadd.f32 0.0, %v779
        %781 = vdwg.mxu0
        %782 = vmatpush.bf16.msra.mxu0 %v712
        %783 = vmatpush.bf16.msra.mxu0 %v709
        %784 = vmatpush.bf16.msra.mxu0 %v706
        %785 = vmatpush.bf16.msra.mxu0 %v703
        %786 = vmatpush.bf16.msra.mxu0 %v700
        %787 = vmatpush.bf16.msra.mxu0 %v697
        %788 = vmatpush.bf16.msra.mxu0 %v694
        %789 = vmatpush.bf16.msra.mxu0 %v691
        %790 = vmatmul.bf16.gmra.mxu0 %v596
        %v791 = vpop.f32.mrf.mxu0
        %v792 = vadd.f32 0.0, %v791
        %v793 = vpop.f32.mrf.mxu0
        %v794 = vadd.f32 0.0, %v793
        %795 = vmatmul.bf16.gmra.mxu0 %v597
        %v796 = vpop.f32.mrf.mxu0
        %v797 = vadd.f32 0.0, %v796
        %v798 = vpop.f32.mrf.mxu0
        %v799 = vadd.f32 0.0, %v798
        %800 = vmatmul.bf16.gmra.mxu0 %v598
        %v801 = vpop.f32.mrf.mxu0
        %v802 = vadd.f32 0.0, %v801
        %v803 = vpop.f32.mrf.mxu0
        %v804 = vadd.f32 0.0, %v803
        %805 = vmatmul.bf16.gmra.mxu0 %v599
        %v806 = vpop.f32.mrf.mxu0
        %v807 = vadd.f32 0.0, %v806
        %v808 = vpop.f32.mrf.mxu0
        %v809 = vadd.f32 0.0, %v808
        %810 = vmatmul.bf16.gmra.mxu0 %v600
        %v811 = vpop.f32.mrf.mxu0
        %v812 = vadd.f32 0.0, %v811
        %v813 = vpop.f32.mrf.mxu0
        %v814 = vadd.f32 0.0, %v813
        %815 = vmatmul.bf16.gmra.mxu0 %v601
        %v816 = vpop.f32.mrf.mxu0
        %v817 = vadd.f32 0.0, %v816
        %v818 = vpop.f32.mrf.mxu0
        %v819 = vadd.f32 0.0, %v818
        %820 = vmatmul.bf16.gmra.mxu0 %v602
        %v821 = vpop.f32.mrf.mxu0
        %v822 = vadd.f32 0.0, %v821
        %v823 = vpop.f32.mrf.mxu0
        %v824 = vadd.f32 0.0, %v823
        %825 = vdwg.mxu0
        %826 = vmatpush.bf16.msra.mxu0 %v713
        %827 = vmatpush.bf16.msra.mxu0 %v710
        %828 = vmatpush.bf16.msra.mxu0 %v707
        %829 = vmatpush.bf16.msra.mxu0 %v704
        %830 = vmatpush.bf16.msra.mxu0 %v701
        %831 = vmatpush.bf16.msra.mxu0 %v698
        %832 = vmatpush.bf16.msra.mxu0 %v695
        %833 = vmatpush.bf16.msra.mxu0 %v692
        %834 = vmatmul.bf16.gmra.mxu0 %v596
        %v835 = vpop.f32.mrf.mxu0
        %v836 = vadd.f32 0.0, %v835
        %v837 = vpop.f32.mrf.mxu0
        %v838 = vadd.f32 0.0, %v837
        %839 = vmatmul.bf16.gmra.mxu0 %v597
        %v840 = vpop.f32.mrf.mxu0
        %v841 = vadd.f32 0.0, %v840
        %v842 = vpop.f32.mrf.mxu0
        %v843 = vadd.f32 0.0, %v842
        %844 = vmatmul.bf16.gmra.mxu0 %v598
        %v845 = vpop.f32.mrf.mxu0
        %v846 = vadd.f32 0.0, %v845
        %v847 = vpop.f32.mrf.mxu0
        %v848 = vadd.f32 0.0, %v847
        %849 = vmatmul.bf16.gmra.mxu0 %v599
        %v850 = vpop.f32.mrf.mxu0
        %v851 = vadd.f32 0.0, %v850
        %v852 = vpop.f32.mrf.mxu0
        %v853 = vadd.f32 0.0, %v852
        %854 = vmatmul.bf16.gmra.mxu0 %v600
        %v855 = vpop.f32.mrf.mxu0
        %v856 = vadd.f32 0.0, %v855
        %v857 = vpop.f32.mrf.mxu0
        %v858 = vadd.f32 0.0, %v857
        %859 = vmatmul.bf16.gmra.mxu0 %v601
        %v860 = vpop.f32.mrf.mxu0
        %v861 = vadd.f32 0.0, %v860
        %v862 = vpop.f32.mrf.mxu0
        %v863 = vadd.f32 0.0, %v862
        %864 = vmatmul.bf16.gmra.mxu0 %v602
        %v865 = vpop.f32.mrf.mxu0
        %v866 = vadd.f32 0.0, %v865
        %v867 = vpop.f32.mrf.mxu0
        %v868 = vadd.f32 0.0, %v867
        %869 = vdwg.mxu0
        %v870 = vadd.f32 %v480, %v748
        %v871 = vadd.f32 %v481, %v792
        %v872 = vadd.f32 %v482, %v836
        %v873 = vadd.f32 %v483, %v750
        %v874 = vadd.f32 %v484, %v794
        %v875 = vadd.f32 %v485, %v838
        %v876 = vadd.f32 %v486, %v753
        %v877 = vadd.f32 %v487, %v797
        %v878 = vadd.f32 %v488, %v841
        %v879 = vadd.f32 %v489, %v755
        %v880 = vadd.f32 %v490, %v799
        %v881 = vadd.f32 %v491, %v843
        %v882 = vadd.f32 %v492, %v758
        %v883 = vadd.f32 %v493, %v802
        %v884 = vadd.f32 %v494, %v846
        %v885 = vadd.f32 %v495, %v760
        %v886 = vadd.f32 %v496, %v804
        %v887 = vadd.f32 %v497, %v848
        %v888 = vadd.f32 %v498, %v763
        %v889 = vadd.f32 %v499, %v807
        %v890 = vadd.f32 %v500, %v851
        %v891 = vadd.f32 %v501, %v765
        %v892 = vadd.f32 %v502, %v809
        %v893 = vadd.f32 %v503, %v853
        %v894 = vadd.f32 %v504, %v768
        %v895 = vadd.f32 %v505, %v812
        %v896 = vadd.f32 %v506, %v856
        %v897 = vadd.f32 %v507, %v770
        %v898 = vadd.f32 %v508, %v814
        %v899 = vadd.f32 %v509, %v858
        %v900 = vadd.f32 %v510, %v773
        %v901 = vadd.f32 %v511, %v817
        %v902 = vadd.f32 %v512, %v861
        %v903 = vadd.f32 %v513, %v775
        %v904 = vadd.f32 %v514, %v819
        %v905 = vadd.f32 %v515, %v863
        %v906 = vadd.f32 %v516, %v778
        %v907 = vadd.f32 %v517, %v822
        %v908 = vadd.f32 %v518, %v866
        %v909 = vadd.f32 %v519, %v780
        %v910 = vadd.f32 %v520, %v824
        %v911 = vadd.f32 %v521, %v868
        %912 = vst [vmem:[#allocation2] sm:$0xff] %v870
        %913 = vst [vmem:[#allocation2 + $0x8] sm:$0xff] %v871
        %914 = vst [vmem:[#allocation2 + $0x10] sm:$0xff] %v872
        %915 = vst [vmem:[#allocation2 + $0x18] sm:$0xff] %v873
        %916 = vst [vmem:[#allocation2 + $0x20] sm:$0xff] %v874
        %917 = vst [vmem:[#allocation2 + $0x28] sm:$0xff] %v875
        %918 = vst [vmem:[#allocation2 + $0x30] sm:$0xff] %v876
        %919 = vst [vmem:[#allocation2 + $0x38] sm:$0xff] %v877
        %920 = vst [vmem:[#allocation2 + $0x40] sm:$0xff] %v878
        %921 = vst [vmem:[#allocation2 + $0x48] sm:$0xff] %v879
        %922 = vst [vmem:[#allocation2 + $0x50] sm:$0xff] %v880
        %923 = vst [vmem:[#allocation2 + $0x58] sm:$0xff] %v881
        %924 = vst [vmem:[#allocation2 + $0x60] sm:$0xff] %v882
        %925 = vst [vmem:[#allocation2 + $0x68] sm:$0xff] %v883
        %926 = vst [vmem:[#allocation2 + $0x70] sm:$0xff] %v884
        %927 = vst [vmem:[#allocation2 + $0x78] sm:$0xff] %v885
        %928 = vst [vmem:[#allocation2 + $0x80] sm:$0xff] %v886
        %929 = vst [vmem:[#allocation2 + $0x88] sm:$0xff] %v887
        %930 = vst [vmem:[#allocation2 + $0x90] sm:$0xff] %v888
        %931 = vst [vmem:[#allocation2 + $0x98] sm:$0xff] %v889
        %932 = vst [vmem:[#allocation2 + $0xa0] sm:$0xff] %v890
        %933 = vst [vmem:[#allocation2 + $0xa8] sm:$0xff] %v891
        %934 = vst [vmem:[#allocation2 + $0xb0] sm:$0xff] %v892
        %935 = vst [vmem:[#allocation2 + $0xb8] sm:$0xff] %v893
        %936 = vst [vmem:[#allocation2 + $0xc0] sm:$0xff] %v894
        %937 = vst [vmem:[#allocation2 + $0xc8] sm:$0xff] %v895
        %938 = vst [vmem:[#allocation2 + $0xd0] sm:$0xff] %v896
        %939 = vst [vmem:[#allocation2 + $0xd8] sm:$0xff] %v897
        %940 = vst [vmem:[#allocation2 + $0xe0] sm:$0xff] %v898
        %941 = vst [vmem:[#allocation2 + $0xe8] sm:$0xff] %v899
        %942 = vst [vmem:[#allocation2 + $0xf0] sm:$0xff] %v900
        %943 = vst [vmem:[#allocation2 + $0xf8] sm:$0xff] %v901
        %944 = vst [vmem:[#allocation2 + $0x100] sm:$0xff] %v902
        %945 = vst [vmem:[#allocation2 + $0x108] sm:$0xff] %v903
        %946 = vst [vmem:[#allocation2 + $0x110] sm:$0xff] %v904
        %947 = vst [vmem:[#allocation2 + $0x118] sm:$0xff] %v905
        %948 = vst [vmem:[#allocation2 + $0x120] sm:$0xff] %v906
        %949 = vst [vmem:[#allocation2 + $0x128] sm:$0xff] %v907
        %950 = vst [vmem:[#allocation2 + $0x130] sm:$0xff] %v908
        %951 = vst [vmem:[#allocation2 + $0x138] sm:$0xff] %v909
        %952 = vst [vmem:[#allocation2 + $0x140] sm:$0xff] %v910
        %953 = vst [vmem:[#allocation2 + $0x148] sm:$0xff] %v911
        %p954 = scmp.eq.s32.totalorder %s21, 2
        // Predicated region
        $region86: #{_conv_bn_add_impl.1} parent=76 // pred_check
          %p955 = pneg %p954
        $region87: #{_conv_bn_add_impl.1} parent=76 // pred_check_branch
          %957 = sbr.rel (%p955) target = $region89
        $region88: #{_conv_bn_add_impl.1} parent=76 // pred_region
          %v958 = vld [vmem:[#allocation2] sm:$0xff]
          %v959 = vld [vmem:[#allocation2 + $0x8] sm:$0xff]
          %v960 = vld [vmem:[#allocation2 + $0x10] sm:$0xff]
          %v961 = vld [vmem:[#allocation2 + $0x18] sm:$0xff]
          %v962 = vld [vmem:[#allocation2 + $0x20] sm:$0xff]
          %v963 = vld [vmem:[#allocation2 + $0x28] sm:$0xff]
          %v964 = vld [vmem:[#allocation2 + $0x30] sm:$0xff]
          %v965 = vld [vmem:[#allocation2 + $0x38] sm:$0xff]
          %v966 = vld [vmem:[#allocation2 + $0x40] sm:$0xff]
          %v967 = vld [vmem:[#allocation2 + $0x48] sm:$0xff]
          %v968 = vld [vmem:[#allocation2 + $0x50] sm:$0xff]
          %v969 = vld [vmem:[#allocation2 + $0x58] sm:$0xff]
          %v970 = vld [vmem:[#allocation2 + $0x60] sm:$0xff]
          %v971 = vld [vmem:[#allocation2 + $0x68] sm:$0xff]
          %v972 = vld [vmem:[#allocation2 + $0x70] sm:$0xff]
          %v973 = vld [vmem:[#allocation2 + $0x78] sm:$0xff]
          %v974 = vld [vmem:[#allocation2 + $0x80] sm:$0xff]
          %v975 = vld [vmem:[#allocation2 + $0x88] sm:$0xff]
          %v976 = vld [vmem:[#allocation2 + $0x90] sm:$0xff]
          %v977 = vld [vmem:[#allocation2 + $0x98] sm:$0xff]
          %v978 = vld [vmem:[#allocation2 + $0xa0] sm:$0xff]
          %v979 = vld [vmem:[#allocation2 + $0xa8] sm:$0xff]
          %v980 = vld [vmem:[#allocation2 + $0xb0] sm:$0xff]
          %v981 = vld [vmem:[#allocation2 + $0xb8] sm:$0xff]
          %v982 = vld [vmem:[#allocation2 + $0xc0] sm:$0xff]
          %v983 = vld [vmem:[#allocation2 + $0xc8] sm:$0xff]
          %v984 = vld [vmem:[#allocation2 + $0xd0] sm:$0xff]
          %v985 = vld [vmem:[#allocation2 + $0xd8] sm:$0xff]
          %v986 = vld [vmem:[#allocation2 + $0xe0] sm:$0xff]
          %v987 = vld [vmem:[#allocation2 + $0xe8] sm:$0xff]
          %v988 = vld [vmem:[#allocation2 + $0xf0] sm:$0xff]
          %v989 = vld [vmem:[#allocation2 + $0xf8] sm:$0xff]
          %v990 = vld [vmem:[#allocation2 + $0x100] sm:$0xff]
          %v991 = vld [vmem:[#allocation2 + $0x108] sm:$0xff]
          %v992 = vld [vmem:[#allocation2 + $0x110] sm:$0xff]
          %v993 = vld [vmem:[#allocation2 + $0x118] sm:$0xff]
          %v994 = vld [vmem:[#allocation2 + $0x120] sm:$0xff]
          %v995 = vld [vmem:[#allocation2 + $0x128] sm:$0xff]
          %v996 = vld [vmem:[#allocation2 + $0x130] sm:$0xff]
          %v997 = vld [vmem:[#allocation2 + $0x138] sm:$0xff]
          %v998 = vld [vmem:[#allocation2 + $0x140] sm:$0xff]
          %v999 = vld [vmem:[#allocation2 + $0x148] sm:$0xff]
          %v1000 = vadd.f32 %v958, %v961
          %v1001 = vadd.f32 %v1000, %v964
          %v1002 = vadd.f32 %v1001, %v967
          %v1003 = vadd.f32 %v1002, %v970
          %v1004 = vadd.f32 %v1003, %v973
          %v1005 = vadd.f32 %v1004, %v976
          %v1006 = vadd.f32 %v1005, %v979
          %v1007 = vadd.f32 %v1006, %v982
          %v1008 = vadd.f32 %v1007, %v985
          %v1009 = vadd.f32 %v1008, %v988
          %v1010 = vadd.f32 %v1009, %v991
          %v1011 = vadd.f32 %v1010, %v994
          %v1012 = vadd.f32 %v1011, %v997
          %v1013 = vrot.slane %v1012, 4
          %v1014 = vadd.f32 %v1012, %v1013
          %v1015 = vrot.slane %v1014, 2
          %v1016 = vadd.f32 %v1014, %v1015
          %v1017 = vrot.slane %v1016, 1
          %v1018 = vadd.f32 %v1016, %v1017
          %v1019 = vadd.f32 %v959, %v962
          %v1020 = vadd.f32 %v1019, %v965
          %v1021 = vadd.f32 %v1020, %v968
          %v1022 = vadd.f32 %v1021, %v971
          %v1023 = vadd.f32 %v1022, %v974
          %v1024 = vadd.f32 %v1023, %v977
          %v1025 = vadd.f32 %v1024, %v980
          %v1026 = vadd.f32 %v1025, %v983
          %v1027 = vadd.f32 %v1026, %v986
          %v1028 = vadd.f32 %v1027, %v989
          %v1029 = vadd.f32 %v1028, %v992
          %v1030 = vadd.f32 %v1029, %v995
          %v1031 = vadd.f32 %v1030, %v998
          %v1032 = vrot.slane %v1031, 4
          %v1033 = vadd.f32 %v1031, %v1032
          %v1034 = vrot.slane %v1033, 2
          %v1035 = vadd.f32 %v1033, %v1034
          %v1036 = vrot.slane %v1035, 1
          %v1037 = vadd.f32 %v1035, %v1036
          %v1038 = vadd.f32 %v960, %v963
          %v1039 = vadd.f32 %v1038, %v966
          %v1040 = vadd.f32 %v1039, %v969
          %v1041 = vadd.f32 %v1040, %v972
          %v1042 = vadd.f32 %v1041, %v975
          %v1043 = vadd.f32 %v1042, %v978
          %v1044 = vadd.f32 %v1043, %v981
          %v1045 = vadd.f32 %v1044, %v984
          %v1046 = vadd.f32 %v1045, %v987
          %v1047 = vadd.f32 %v1046, %v990
          %v1048 = vadd.f32 %v1047, %v993
          %v1049 = vadd.f32 %v1048, %v996
          %v1050 = vadd.f32 %v1049, %v999
          %v1051 = vrot.slane %v1050, 4
          %v1052 = vadd.f32 %v1050, %v1051
          %v1053 = vrot.slane %v1052, 2
          %v1054 = vadd.f32 %v1052, %v1053
          %v1055 = vrot.slane %v1054, 1
          %v1056 = vadd.f32 %v1054, %v1055
          %v1057 = vmul.f32 %v1018, 0.010204081
          %v1058 = vmul.f32 %v1037, 0.010204081
          %v1059 = vmul.f32 %v1056, 0.010204081
          %v1060 = vsub.f32 %v958, %v1057
          %v1061 = vsub.f32 %v959, %v1058
          %v1062 = vsub.f32 %v960, %v1059
          %v1063 = vsub.f32 %v961, %v1057
          %v1064 = vsub.f32 %v962, %v1058
          %v1065 = vsub.f32 %v963, %v1059
          %v1066 = vsub.f32 %v964, %v1057
          %v1067 = vsub.f32 %v965, %v1058
          %v1068 = vsub.f32 %v966, %v1059
          %v1069 = vsub.f32 %v967, %v1057
          %v1070 = vsub.f32 %v968, %v1058
          %v1071 = vsub.f32 %v969, %v1059
          %v1072 = vsub.f32 %v970, %v1057
          %v1073 = vsub.f32 %v971, %v1058
          %v1074 = vsub.f32 %v972, %v1059
          %v1075 = vsub.f32 %v973, %v1057
          %v1076 = vsub.f32 %v974, %v1058
          %v1077 = vsub.f32 %v975, %v1059
          %v1078 = vsub.f32 %v976, %v1057
          %v1079 = vsub.f32 %v977, %v1058
          %v1080 = vsub.f32 %v978, %v1059
          %v1081 = vsub.f32 %v979, %v1057
          %v1082 = vsub.f32 %v980, %v1058
          %v1083 = vsub.f32 %v981, %v1059
          %v1084 = vsub.f32 %v982, %v1057
          %v1085 = vsub.f32 %v983, %v1058
          %v1086 = vsub.f32 %v984, %v1059
          %v1087 = vsub.f32 %v985, %v1057
          %v1088 = vsub.f32 %v986, %v1058
          %v1089 = vsub.f32 %v987, %v1059
          %v1090 = vsub.f32 %v988, %v1057
          %v1091 = vsub.f32 %v989, %v1058
          %v1092 = vsub.f32 %v990, %v1059
          %v1093 = vsub.f32 %v991, %v1057
          %v1094 = vsub.f32 %v992, %v1058
          %v1095 = vsub.f32 %v993, %v1059
          %v1096 = vsub.f32 %v994, %v1057
          %v1097 = vsub.f32 %v995, %v1058
          %v1098 = vsub.f32 %v996, %v1059
          %v1099 = vsub.f32 %v997, %v1057
          %v1100 = vsub.f32 %v998, %v1058
          %v1101 = vsub.f32 %v999, %v1059
          %v1102 = vlaneseq
          %v1103 = vshrl.u32 %v1102, 7
          %v1104 = vadd.s32 %v1103, 8
          %v1105 = vadd.s32 %v1103, 16
          %v1106 = vadd.s32 %v1103, 24
          %v1107 = vadd.s32 %v1103, 32
          %v1108 = vadd.s32 %v1103, 40
          %v1109 = vadd.s32 %v1103, 48
          %v1110 = vadd.s32 %v1103, 56
          %v1111 = vadd.s32 %v1103, 64
          %v1112 = vadd.s32 %v1103, 72
          %v1113 = vadd.s32 %v1103, 80
          %v1114 = vadd.s32 %v1103, 88
          %v1115 = vadd.s32 %v1103, 96
          %v1116 = vadd.s32 %v1103, 104
          %vm1117 = vcmp.lt.s32.totalorder %v1103, 98
          %vm1118 = vcmp.lt.s32.totalorder %v1104, 98
          %vm1119 = vcmp.lt.s32.totalorder %v1105, 98
          %vm1120 = vcmp.lt.s32.totalorder %v1106, 98
          %vm1121 = vcmp.lt.s32.totalorder %v1107, 98
          %vm1122 = vcmp.lt.s32.totalorder %v1108, 98
          %vm1123 = vcmp.lt.s32.totalorder %v1109, 98
          %vm1124 = vcmp.lt.s32.totalorder %v1110, 98
          %vm1125 = vcmp.lt.s32.totalorder %v1111, 98
          %vm1126 = vcmp.lt.s32.totalorder %v1112, 98
          %vm1127 = vcmp.lt.s32.totalorder %v1113, 98
          %vm1128 = vcmp.lt.s32.totalorder %v1114, 98
          %vm1129 = vcmp.lt.s32.totalorder %v1115, 98
          %vm1130 = vcmp.lt.s32.totalorder %v1116, 98
          %v1131 = vsel %vm1117, 1, 0
          %v1132 = vsel %vm1118, 1, 0
          %v1133 = vsel %vm1119, 1, 0
          %v1134 = vsel %vm1120, 1, 0
          %v1135 = vsel %vm1121, 1, 0
          %v1136 = vsel %vm1122, 1, 0
          %v1137 = vsel %vm1123, 1, 0
          %v1138 = vsel %vm1124, 1, 0
          %v1139 = vsel %vm1125, 1, 0
          %v1140 = vsel %vm1126, 1, 0
          %v1141 = vsel %vm1127, 1, 0
          %v1142 = vsel %vm1128, 1, 0
          %v1143 = vsel %vm1129, 1, 0
          %v1144 = vsel %vm1130, 1, 0
          %vm1145 = vcmp.eq.s32.totalorder %v1131, 1
          %vm1146 = vcmp.eq.s32.totalorder %v1132, 1
          %vm1147 = vcmp.eq.s32.totalorder %v1133, 1
          %vm1148 = vcmp.eq.s32.totalorder %v1134, 1
          %vm1149 = vcmp.eq.s32.totalorder %v1135, 1
          %vm1150 = vcmp.eq.s32.totalorder %v1136, 1
          %vm1151 = vcmp.eq.s32.totalorder %v1137, 1
          %vm1152 = vcmp.eq.s32.totalorder %v1138, 1
          %vm1153 = vcmp.eq.s32.totalorder %v1139, 1
          %vm1154 = vcmp.eq.s32.totalorder %v1140, 1
          %vm1155 = vcmp.eq.s32.totalorder %v1141, 1
          %vm1156 = vcmp.eq.s32.totalorder %v1142, 1
          %vm1157 = vcmp.eq.s32.totalorder %v1143, 1
          %vm1158 = vcmp.eq.s32.totalorder %v1144, 1
          %v1159 = vsel %vm1145, %v1060, 0.0
          %v1160 = vsel %vm1145, %v1061, 0.0
          %v1161 = vsel %vm1145, %v1062, 0.0
          %v1162 = vsel %vm1146, %v1063, 0.0
          %v1163 = vsel %vm1146, %v1064, 0.0
          %v1164 = vsel %vm1146, %v1065, 0.0
          %v1165 = vsel %vm1147, %v1066, 0.0
          %v1166 = vsel %vm1147, %v1067, 0.0
          %v1167 = vsel %vm1147, %v1068, 0.0
          %v1168 = vsel %vm1148, %v1069, 0.0
          %v1169 = vsel %vm1148, %v1070, 0.0
          %v1170 = vsel %vm1148, %v1071, 0.0
          %v1171 = vsel %vm1149, %v1072, 0.0
          %v1172 = vsel %vm1149, %v1073, 0.0
          %v1173 = vsel %vm1149, %v1074, 0.0
          %v1174 = vsel %vm1150, %v1075, 0.0
          %v1175 = vsel %vm1150, %v1076, 0.0
          %v1176 = vsel %vm1150, %v1077, 0.0
          %v1177 = vsel %vm1151, %v1078, 0.0
          %v1178 = vsel %vm1151, %v1079, 0.0
          %v1179 = vsel %vm1151, %v1080, 0.0
          %v1180 = vsel %vm1152, %v1081, 0.0
          %v1181 = vsel %vm1152, %v1082, 0.0
          %v1182 = vsel %vm1152, %v1083, 0.0
          %v1183 = vsel %vm1153, %v1084, 0.0
          %v1184 = vsel %vm1153, %v1085, 0.0
          %v1185 = vsel %vm1153, %v1086, 0.0
          %v1186 = vsel %vm1154, %v1087, 0.0
          %v1187 = vsel %vm1154, %v1088, 0.0
          %v1188 = vsel %vm1154, %v1089, 0.0
          %v1189 = vsel %vm1155, %v1090, 0.0
          %v1190 = vsel %vm1155, %v1091, 0.0
          %v1191 = vsel %vm1155, %v1092, 0.0
          %v1192 = vsel %vm1156, %v1093, 0.0
          %v1193 = vsel %vm1156, %v1094, 0.0
          %v1194 = vsel %vm1156, %v1095, 0.0
          %v1195 = vsel %vm1157, %v1096, 0.0
          %v1196 = vsel %vm1157, %v1097, 0.0
          %v1197 = vsel %vm1157, %v1098, 0.0
          %v1198 = vsel %vm1158, %v1099, 0.0
          %v1199 = vsel %vm1158, %v1100, 0.0
          %v1200 = vsel %vm1158, %v1101, 0.0
          %v1201 = vmul.f32 %v1159, %v1159
          %v1202 = vmul.f32 %v1160, %v1160
          %v1203 = vmul.f32 %v1161, %v1161
          %v1204 = vmul.f32 %v1162, %v1162
          %v1205 = vmul.f32 %v1163, %v1163
          %v1206 = vmul.f32 %v1164, %v1164
          %v1207 = vmul.f32 %v1165, %v1165
          %v1208 = vmul.f32 %v1166, %v1166
          %v1209 = vmul.f32 %v1167, %v1167
          %v1210 = vmul.f32 %v1168, %v1168
          %v1211 = vmul.f32 %v1169, %v1169
          %v1212 = vmul.f32 %v1170, %v1170
          %v1213 = vmul.f32 %v1171, %v1171
          %v1214 = vmul.f32 %v1172, %v1172
          %v1215 = vmul.f32 %v1173, %v1173
          %v1216 = vmul.f32 %v1174, %v1174
          %v1217 = vmul.f32 %v1175, %v1175
          %v1218 = vmul.f32 %v1176, %v1176
          %v1219 = vmul.f32 %v1177, %v1177
          %v1220 = vmul.f32 %v1178, %v1178
          %v1221 = vmul.f32 %v1179, %v1179
          %v1222 = vmul.f32 %v1180, %v1180
          %v1223 = vmul.f32 %v1181, %v1181
          %v1224 = vmul.f32 %v1182, %v1182
          %v1225 = vmul.f32 %v1183, %v1183
          %v1226 = vmul.f32 %v1184, %v1184
          %v1227 = vmul.f32 %v1185, %v1185
          %v1228 = vmul.f32 %v1186, %v1186
          %v1229 = vmul.f32 %v1187, %v1187
          %v1230 = vmul.f32 %v1188, %v1188
          %v1231 = vmul.f32 %v1189, %v1189
          %v1232 = vmul.f32 %v1190, %v1190
          %v1233 = vmul.f32 %v1191, %v1191
          %v1234 = vmul.f32 %v1192, %v1192
          %v1235 = vmul.f32 %v1193, %v1193
          %v1236 = vmul.f32 %v1194, %v1194
          %v1237 = vmul.f32 %v1195, %v1195
          %v1238 = vmul.f32 %v1196, %v1196
          %v1239 = vmul.f32 %v1197, %v1197
          %v1240 = vmul.f32 %v1198, %v1198
          %v1241 = vmul.f32 %v1199, %v1199
          %v1242 = vmul.f32 %v1200, %v1200
          %v1243 = vadd.f32 %v1201, %v1204
          %v1244 = vadd.f32 %v1243, %v1207
          %v1245 = vadd.f32 %v1244, %v1210
          %v1246 = vadd.f32 %v1245, %v1213
          %v1247 = vadd.f32 %v1246, %v1216
          %v1248 = vadd.f32 %v1247, %v1219
          %v1249 = vadd.f32 %v1248, %v1222
          %v1250 = vadd.f32 %v1249, %v1225
          %v1251 = vadd.f32 %v1250, %v1228
          %v1252 = vadd.f32 %v1251, %v1231
          %v1253 = vadd.f32 %v1252, %v1234
          %v1254 = vadd.f32 %v1253, %v1237
          %v1255 = vadd.f32 %v1254, %v1240
          %v1256 = vrot.slane %v1255, 4
          %v1257 = vadd.f32 %v1255, %v1256
          %v1258 = vrot.slane %v1257, 2
          %v1259 = vadd.f32 %v1257, %v1258
          %v1260 = vrot.slane %v1259, 1
          %v1261 = vadd.f32 %v1259, %v1260
          %v1262 = vadd.f32 %v1202, %v1205
          %v1263 = vadd.f32 %v1262, %v1208
          %v1264 = vadd.f32 %v1263, %v1211
          %v1265 = vadd.f32 %v1264, %v1214
          %v1266 = vadd.f32 %v1265, %v1217
          %v1267 = vadd.f32 %v1266, %v1220
          %v1268 = vadd.f32 %v1267, %v1223
          %v1269 = vadd.f32 %v1268, %v1226
          %v1270 = vadd.f32 %v1269, %v1229
          %v1271 = vadd.f32 %v1270, %v1232
          %v1272 = vadd.f32 %v1271, %v1235
          %v1273 = vadd.f32 %v1272, %v1238
          %v1274 = vadd.f32 %v1273, %v1241
          %v1275 = vrot.slane %v1274, 4
          %v1276 = vadd.f32 %v1274, %v1275
          %v1277 = vrot.slane %v1276, 2
          %v1278 = vadd.f32 %v1276, %v1277
          %v1279 = vrot.slane %v1278, 1
          %v1280 = vadd.f32 %v1278, %v1279
          %v1281 = vadd.f32 %v1203, %v1206
          %v1282 = vadd.f32 %v1281, %v1209
          %v1283 = vadd.f32 %v1282, %v1212
          %v1284 = vadd.f32 %v1283, %v1215
          %v1285 = vadd.f32 %v1284, %v1218
          %v1286 = vadd.f32 %v1285, %v1221
          %v1287 = vadd.f32 %v1286, %v1224
          %v1288 = vadd.f32 %v1287, %v1227
          %v1289 = vadd.f32 %v1288, %v1230
          %v1290 = vadd.f32 %v1289, %v1233
          %v1291 = vadd.f32 %v1290, %v1236
          %v1292 = vadd.f32 %v1291, %v1239
          %v1293 = vadd.f32 %v1292, %v1242
          %v1294 = vrot.slane %v1293, 4
          %v1295 = vadd.f32 %v1293, %v1294
          %v1296 = vrot.slane %v1295, 2
          %v1297 = vadd.f32 %v1295, %v1296
          %v1298 = vrot.slane %v1297, 1
          %v1299 = vadd.f32 %v1297, %v1298
          %v1300 = vmul.f32 %v1261, 0.010204081
          %v1301 = vmul.f32 %v1280, 0.010204081
          %v1302 = vmul.f32 %v1299, 0.010204081
          %v1303 = vadd.f32 %v1300, 1e-05
          %v1304 = vadd.f32 %v1301, 1e-05
          %v1305 = vadd.f32 %v1302, 1e-05
          %v1306 = vrsqrt.pop %v1303
          %v1307 = vmul.f32 %v1306, %v1303
          %v1308 = vmul.f32 %v1307, %v1306
          %v1309 = vmul.f32 0.5, %v1308
          %v1310 = vsub.f32 1.5, %v1309
          %v1311 = vmul.f32 %v1306, %v1310
          %vm1312 = vweird.f32 %v1303
          %vm1313 = vweird.f32 %v1306
          %vm1314 = vmor %vm1312, %vm1313
          %v1315 = vsel %vm1314, %v1306, %v1311
          %v1316 = vrsqrt.pop %v1304
          %v1317 = vmul.f32 %v1316, %v1304
          %v1318 = vmul.f32 %v1317, %v1316
          %v1319 = vmul.f32 0.5, %v1318
          %v1320 = vsub.f32 1.5, %v1319
          %v1321 = vmul.f32 %v1316, %v1320
          %vm1322 = vweird.f32 %v1304
          %vm1323 = vweird.f32 %v1316
          %vm1324 = vmor %vm1322, %vm1323
          %v1325 = vsel %vm1324, %v1316, %v1321
          %v1326 = vrsqrt.pop %v1305
          %v1327 = vmul.f32 %v1326, %v1305
          %v1328 = vmul.f32 %v1327, %v1326
          %v1329 = vmul.f32 0.5, %v1328
          %v1330 = vsub.f32 1.5, %v1329
          %v1331 = vmul.f32 %v1326, %v1330
          %vm1332 = vweird.f32 %v1305
          %vm1333 = vweird.f32 %v1326
          %vm1334 = vmor %vm1332, %vm1333
          %v1335 = vsel %vm1334, %v1326, %v1331
          %v1336 = vld [vmem:[%s426] sm:$0xff]
          %v1337 = vld [vmem:[%s426 + $0x8] sm:$0xff]
          %v1338 = vld [vmem:[%s426 + $0x10] sm:$0xff]
          %v1339 = vld [vmem:[%s426 + $0x18] sm:$0xff]
          %v1340 = vld [vmem:[%s426 + $0x20] sm:$0xff]
          %v1341 = vld [vmem:[%s426 + $0x28] sm:$0xff]
          %v1342 = vld [vmem:[%s426 + $0x30] sm:$0xff]
          %v1343 = vld [vmem:[%s426 + $0x38] sm:$0xff]
          %v1344 = vld [vmem:[%s426 + $0x40] sm:$0xff]
          %v1345 = vld [vmem:[%s426 + $0x48] sm:$0xff]
          %v1346 = vld [vmem:[%s426 + $0x50] sm:$0xff]
          %v1347 = vld [vmem:[%s426 + $0x58] sm:$0xff]
          %v1348 = vld [vmem:[%s426 + $0x60] sm:$0xff]
          %v1349 = vld [vmem:[%s426 + $0x68] sm:$0xff]
          %v1350 = vld [vmem:[%s426 + $0x70] sm:$0xff]
          %v1351 = vld [vmem:[%s426 + $0x78] sm:$0xff]
          %v1352 = vld [vmem:[%s426 + $0x80] sm:$0xff]
          %v1353 = vld [vmem:[%s426 + $0x88] sm:$0xff]
          %v1354 = vld [vmem:[%s426 + $0x90] sm:$0xff]
          %v1355 = vld [vmem:[%s426 + $0x98] sm:$0xff]
          %v1356 = vld [vmem:[%s426 + $0xa0] sm:$0xff]
          %v1357 = vld [vmem:[%s426 + $0xa8] sm:$0xff]
          %v1358 = vld [vmem:[%s426 + $0xb0] sm:$0xff]
          %v1359 = vld [vmem:[%s426 + $0xb8] sm:$0xff]
          %v1360 = vld [vmem:[%s426 + $0xc0] sm:$0xff]
          %v1361 = vld [vmem:[%s426 + $0xc8] sm:$0xff]
          %v1362 = vld [vmem:[%s426 + $0xd0] sm:$0xff]
          %v1363 = vld [vmem:[%s426 + $0xd8] sm:$0xff]
          %v1364 = vld [vmem:[%s426 + $0xe0] sm:$0xff]
          %v1365 = vld [vmem:[%s426 + $0xe8] sm:$0xff]
          %v1366 = vld [vmem:[%s426 + $0xf0] sm:$0xff]
          %v1367 = vld [vmem:[%s426 + $0xf8] sm:$0xff]
          %v1368 = vld [vmem:[%s426 + $0x100] sm:$0xff]
          %v1369 = vld [vmem:[%s426 + $0x108] sm:$0xff]
          %v1370 = vld [vmem:[%s426 + $0x110] sm:$0xff]
          %v1371 = vld [vmem:[%s426 + $0x118] sm:$0xff]
          %v1372 = vld [vmem:[%s426 + $0x120] sm:$0xff]
          %v1373 = vld [vmem:[%s426 + $0x128] sm:$0xff]
          %v1374 = vld [vmem:[%s426 + $0x130] sm:$0xff]
          %v1375 = vld [vmem:[%s426 + $0x138] sm:$0xff]
          %v1376 = vld [vmem:[%s426 + $0x140] sm:$0xff]
          %v1377 = vld [vmem:[%s426 + $0x148] sm:$0xff]
          %v1378 = vld [vmem:[%s415] sm:$0x7]
          %v1380 = vperm.slane %v1378, 0
          %v1381 = vperm.slane %v1378, 1
          %v1382 = vperm.slane %v1378, 2
          %v1386 = vmul.f32 %v1315, %v1380
          %v1387 = vmul.f32 %v1325, %v1381
          %v1388 = vmul.f32 %v1335, %v1382
          %v1389 = vperm.slane %v1386, 0
          %v1390 = vperm.slane %v1387, 0
          %v1391 = vperm.slane %v1388, 0
          %v1392 = vmul.f32 %v1060, %v1389
          %v1393 = vmul.f32 %v1061, %v1390
          %v1394 = vmul.f32 %v1062, %v1391
          %v1395 = vmul.f32 %v1063, %v1389
          %v1396 = vmul.f32 %v1064, %v1390
          %v1397 = vmul.f32 %v1065, %v1391
          %v1398 = vmul.f32 %v1066, %v1389
          %v1399 = vmul.f32 %v1067, %v1390
          %v1400 = vmul.f32 %v1068, %v1391
          %v1401 = vmul.f32 %v1069, %v1389
          %v1402 = vmul.f32 %v1070, %v1390
          %v1403 = vmul.f32 %v1071, %v1391
          %v1404 = vmul.f32 %v1072, %v1389
          %v1405 = vmul.f32 %v1073, %v1390
          %v1406 = vmul.f32 %v1074, %v1391
          %v1407 = vmul.f32 %v1075, %v1389
          %v1408 = vmul.f32 %v1076, %v1390
          %v1409 = vmul.f32 %v1077, %v1391
          %v1410 = vmul.f32 %v1078, %v1389
          %v1411 = vmul.f32 %v1079, %v1390
          %v1412 = vmul.f32 %v1080, %v1391
          %v1413 = vmul.f32 %v1081, %v1389
          %v1414 = vmul.f32 %v1082, %v1390
          %v1415 = vmul.f32 %v1083, %v1391
          %v1416 = vmul.f32 %v1084, %v1389
          %v1417 = vmul.f32 %v1085, %v1390
          %v1418 = vmul.f32 %v1086, %v1391
          %v1419 = vmul.f32 %v1087, %v1389
          %v1420 = vmul.f32 %v1088, %v1390
          %v1421 = vmul.f32 %v1089, %v1391
          %v1422 = vmul.f32 %v1090, %v1389
          %v1423 = vmul.f32 %v1091, %v1390
          %v1424 = vmul.f32 %v1092, %v1391
          %v1425 = vmul.f32 %v1093, %v1389
          %v1426 = vmul.f32 %v1094, %v1390
          %v1427 = vmul.f32 %v1095, %v1391
          %v1428 = vmul.f32 %v1096, %v1389
          %v1429 = vmul.f32 %v1097, %v1390
          %v1430 = vmul.f32 %v1098, %v1391
          %v1431 = vmul.f32 %v1099, %v1389
          %v1432 = vmul.f32 %v1100, %v1390
          %v1433 = vmul.f32 %v1101, %v1391
          %v1434 = vadd.f32 %v1336, %v1392
          %v1435 = vadd.f32 %v1337, %v1393
          %v1436 = vadd.f32 %v1338, %v1394
          %v1437 = vadd.f32 %v1339, %v1395
          %v1438 = vadd.f32 %v1340, %v1396
          %v1439 = vadd.f32 %v1341, %v1397
          %v1440 = vadd.f32 %v1342, %v1398
          %v1441 = vadd.f32 %v1343, %v1399
          %v1442 = vadd.f32 %v1344, %v1400
          %v1443 = vadd.f32 %v1345, %v1401
          %v1444 = vadd.f32 %v1346, %v1402
          %v1445 = vadd.f32 %v1347, %v1403
          %v1446 = vadd.f32 %v1348, %v1404
          %v1447 = vadd.f32 %v1349, %v1405
          %v1448 = vadd.f32 %v1350, %v1406
          %v1449 = vadd.f32 %v1351, %v1407
          %v1450 = vadd.f32 %v1352, %v1408
          %v1451 = vadd.f32 %v1353, %v1409
          %v1452 = vadd.f32 %v1354, %v1410
          %v1453 = vadd.f32 %v1355, %v1411
          %v1454 = vadd.f32 %v1356, %v1412
          %v1455 = vadd.f32 %v1357, %v1413
          %v1456 = vadd.f32 %v1358, %v1414
          %v1457 = vadd.f32 %v1359, %v1415
          %v1458 = vadd.f32 %v1360, %v1416
          %v1459 = vadd.f32 %v1361, %v1417
          %v1460 = vadd.f32 %v1362, %v1418
          %v1461 = vadd.f32 %v1363, %v1419
          %v1462 = vadd.f32 %v1364, %v1420
          %v1463 = vadd.f32 %v1365, %v1421
          %v1464 = vadd.f32 %v1366, %v1422
          %v1465 = vadd.f32 %v1367, %v1423
          %v1466 = vadd.f32 %v1368, %v1424
          %v1467 = vadd.f32 %v1369, %v1425
          %v1468 = vadd.f32 %v1370, %v1426
          %v1469 = vadd.f32 %v1371, %v1427
          %v1470 = vadd.f32 %v1372, %v1428
          %v1471 = vadd.f32 %v1373, %v1429
          %v1472 = vadd.f32 %v1374, %v1430
          %v1473 = vadd.f32 %v1375, %v1431
          %v1474 = vadd.f32 %v1376, %v1432
          %v1475 = vadd.f32 %v1377, %v1433
          %v1476 = vld [vmem:[%s420] sm:$0x7]
          %v1478 = vperm.slane %v1476, 0
          %v1479 = vperm.slane %v1476, 1
          %v1480 = vperm.slane %v1476, 2
          %v1484 = vadd.f32 %v1434, %v1478
          %v1485 = vadd.f32 %v1435, %v1479
          %v1486 = vadd.f32 %v1436, %v1480
          %v1487 = vadd.f32 %v1437, %v1478
          %v1488 = vadd.f32 %v1438, %v1479
          %v1489 = vadd.f32 %v1439, %v1480
          %v1490 = vadd.f32 %v1440, %v1478
          %v1491 = vadd.f32 %v1441, %v1479
          %v1492 = vadd.f32 %v1442, %v1480
          %v1493 = vadd.f32 %v1443, %v1478
          %v1494 = vadd.f32 %v1444, %v1479
          %v1495 = vadd.f32 %v1445, %v1480
          %v1496 = vadd.f32 %v1446, %v1478
          %v1497 = vadd.f32 %v1447, %v1479
          %v1498 = vadd.f32 %v1448, %v1480
          %v1499 = vadd.f32 %v1449, %v1478
          %v1500 = vadd.f32 %v1450, %v1479
          %v1501 = vadd.f32 %v1451, %v1480
          %v1502 = vadd.f32 %v1452, %v1478
          %v1503 = vadd.f32 %v1453, %v1479
          %v1504 = vadd.f32 %v1454, %v1480
          %v1505 = vadd.f32 %v1455, %v1478
          %v1506 = vadd.f32 %v1456, %v1479
          %v1507 = vadd.f32 %v1457, %v1480
          %v1508 = vadd.f32 %v1458, %v1478
          %v1509 = vadd.f32 %v1459, %v1479
          %v1510 = vadd.f32 %v1460, %v1480
          %v1511 = vadd.f32 %v1461, %v1478
          %v1512 = vadd.f32 %v1462, %v1479
          %v1513 = vadd.f32 %v1463, %v1480
          %v1514 = vadd.f32 %v1464, %v1478
          %v1515 = vadd.f32 %v1465, %v1479
          %v1516 = vadd.f32 %v1466, %v1480
          %v1517 = vadd.f32 %v1467, %v1478
          %v1518 = vadd.f32 %v1468, %v1479
          %v1519 = vadd.f32 %v1469, %v1480
          %v1520 = vadd.f32 %v1470, %v1478
          %v1521 = vadd.f32 %v1471, %v1479
          %v1522 = vadd.f32 %v1472, %v1480
          %v1523 = vadd.f32 %v1473, %v1478
          %v1524 = vadd.f32 %v1474, %v1479
          %v1525 = vadd.f32 %v1475, %v1480
          %1526 = vst [vmem:[%s432] sm:$0xff] %v1484
          %1527 = vst [vmem:[%s432 + $0x8] sm:$0xff] %v1485
          %1528 = vst [vmem:[%s432 + $0x10] sm:$0xff] %v1486
          %1529 = vst [vmem:[%s432 + $0x18] sm:$0xff] %v1487
          %1530 = vst [vmem:[%s432 + $0x20] sm:$0xff] %v1488
          %1531 = vst [vmem:[%s432 + $0x28] sm:$0xff] %v1489
          %1532 = vst [vmem:[%s432 + $0x30] sm:$0xff] %v1490
          %1533 = vst [vmem:[%s432 + $0x38] sm:$0xff] %v1491
          %1534 = vst [vmem:[%s432 + $0x40] sm:$0xff] %v1492
          %1535 = vst [vmem:[%s432 + $0x48] sm:$0xff] %v1493
          %1536 = vst [vmem:[%s432 + $0x50] sm:$0xff] %v1494
          %1537 = vst [vmem:[%s432 + $0x58] sm:$0xff] %v1495
          %1538 = vst [vmem:[%s432 + $0x60] sm:$0xff] %v1496
          %1539 = vst [vmem:[%s432 + $0x68] sm:$0xff] %v1497
          %1540 = vst [vmem:[%s432 + $0x70] sm:$0xff] %v1498
          %1541 = vst [vmem:[%s432 + $0x78] sm:$0xff] %v1499
          %1542 = vst [vmem:[%s432 + $0x80] sm:$0xff] %v1500
          %1543 = vst [vmem:[%s432 + $0x88] sm:$0xff] %v1501
          %1544 = vst [vmem:[%s432 + $0x90] sm:$0xff] %v1502
          %1545 = vst [vmem:[%s432 + $0x98] sm:$0xff] %v1503
          %1546 = vst [vmem:[%s432 + $0xa0] sm:$0xff] %v1504
          %1547 = vst [vmem:[%s432 + $0xa8] sm:$0xff] %v1505
          %1548 = vst [vmem:[%s432 + $0xb0] sm:$0xff] %v1506
          %1549 = vst [vmem:[%s432 + $0xb8] sm:$0xff] %v1507
          %1550 = vst [vmem:[%s432 + $0xc0] sm:$0xff] %v1508
          %1551 = vst [vmem:[%s432 + $0xc8] sm:$0xff] %v1509
          %1552 = vst [vmem:[%s432 + $0xd0] sm:$0xff] %v1510
          %1553 = vst [vmem:[%s432 + $0xd8] sm:$0xff] %v1511
          %1554 = vst [vmem:[%s432 + $0xe0] sm:$0xff] %v1512
          %1555 = vst [vmem:[%s432 + $0xe8] sm:$0xff] %v1513
          %1556 = vst [vmem:[%s432 + $0xf0] sm:$0xff] %v1514
          %1557 = vst [vmem:[%s432 + $0xf8] sm:$0xff] %v1515
          %1558 = vst [vmem:[%s432 + $0x100] sm:$0xff] %v1516
          %1559 = vst [vmem:[%s432 + $0x108] sm:$0xff] %v1517
          %1560 = vst [vmem:[%s432 + $0x110] sm:$0xff] %v1518
          %1561 = vst [vmem:[%s432 + $0x118] sm:$0xff] %v1519
          %1562 = vst [vmem:[%s432 + $0x120] sm:$0xff] %v1520
          %1563 = vst [vmem:[%s432 + $0x128] sm:$0xff] %v1521
          %1564 = vst [vmem:[%s432 + $0x130] sm:$0xff] %v1522
          %1565 = vst [vmem:[%s432 + $0x138] sm:$0xff] %v1523
          %1566 = vst [vmem:[%s432 + $0x140] sm:$0xff] %v1524
          %1567 = vst [vmem:[%s432 + $0x148] sm:$0xff] %v1525
        $region89: #{_conv_bn_add_impl.1} parent=76 // pred_fallthru
          _
        %s1568 = smul.u32 3, %s20
        %p1569 = scmp.lt.s32.totalorder %s1568, 2
        %s1570 = scalar_select %p1569, %s1568, 2
        %s1571 = smul.addr %s1570, 8
        %s1572 = scalar_lea.vmem %s5, %s1571
        // Predicated region
        $region90: #{_conv_bn_add_impl.1} parent=76 // pred_check
          %p1573 = pneg %p178
        $region91: #{_conv_bn_add_impl.1} parent=76 // pred_check_branch
          %1575 = sbr.rel (%p1573) target = $region93
        $region92: #{_conv_bn_add_impl.1} parent=76 // pred_region
          %s1576 = smul.u32 3, %s20
        $region93: #{_conv_bn_add_impl.1} parent=76 // pred_fallthru
          _
        // Predicated region
        $region94: #{_conv_bn_add_impl.1} parent=76 // pred_check
          %p1577 = pneg %p178
        $region95: #{_conv_bn_add_impl.1} parent=76 // pred_check_branch
          %1579 = sbr.rel (%p1577) target = $region97
        $region96: #{_conv_bn_add_impl.1} parent=76 // pred_region
          %s1580 = smul.u32 3, %s20
          %p1581 = scmp.lt.s32.totalorder %s1580, 2
          %s1582 = scalar_select %p1581, %s1580, 2
          %s1583 = smul.addr %s1582, 8
          %s1584 = scalar_lea.vmem %s5, %s1583
        $region97: #{_conv_bn_add_impl.1} parent=76 // pred_fallthru
          _
      $region77: #{_conv_bn_add_impl.1} parent=5 // pred_fallthru
        _
      %p1585 = scmp.le.s32.totalorder 2, %s11
      // Predicated region
      $region98: #{_conv_bn_add_impl.1} parent=5 // pred_check
        %p1586 = pneg %p1585
      $region99: #{_conv_bn_add_impl.1} parent=5 // pred_check_branch
        %1588 = sbr.rel (%p1586) target = $region101
      $region100: #{_conv_bn_add_impl.1} parent=5 // pred_region
        %s1589 = ssub.s32 %s11, 2
      $region101: #{_conv_bn_add_impl.1} parent=5 // pred_fallthru
        _
    $region6: #{_conv_bn_add_impl.1} parent=1 // loop_footer
      %s15 = sadd.s32 1, %s11
    $region7: #{_conv_bn_add_impl.1} parent=1 // loop_footer_branch
      %10 = sbr.rel target = $region3
    $region8: #{_conv_bn_add_impl.1} parent=1 // loop_exit
      _

</llo_original>
